<compile_context>
chip_gen: v6e
topology: v6e:2x2x1
jax: 0.10.0
libtpu: 0.0.40
codegen_flags: <defaults>
</compile_context>

<pallas_src>
import functools
from math import sqrt, lcm

import jax
import jax.numpy as jnp
from jax import lax
from jax.experimental import pallas as pl
from jax.experimental.pallas import tpu as pltpu


# ----------------------------------------------------------------------------
# Tiling helpers
# ----------------------------------------------------------------------------
def _pick_tile(n, cap, mult):
    """Largest t <= cap with t % mult == 0 and n % t == 0, else the full extent.

    Guarantees every block dim is either a multiple of `mult` (8 for sublane
    dims, 128 for lane dims) or the full array extent, satisfying the Mosaic
    (8, 128) divisibility rule and avoiding degenerate (tiny) tiles.
    """
    if n <= cap:
        return n
    t = (cap // mult) * mult
    while t >= mult:
        if n % t == 0:
            return t
        t -= mult
    return n  # full extent is always legal


@functools.lru_cache(maxsize=1)
def _chip_config():
    """Per-generation tile caps + scoped-VMEM limit (v5e/v6e 128 MiB, v7x 64 MiB)."""
    try:
        vmem = pltpu.get_tpu_info().vmem_capacity_bytes
    except Exception:
        vmem = 64 * 1024 * 1024
    big = vmem >= 100 * 1024 * 1024
    return dict(
        tm_cap=512 if big else 256,     # token tile (sublane dim)
        tn_cap=1024 if big else 512,    # output-feature tile (lane dim)
        tk_cap=1024 if big else 512,    # reduction tile
        tl_cap=256 if big else 128,     # attention query tile
        ts_cap=512 if big else 256,     # attention key/value tile
        vmem_limit=min(int(vmem * 5 // 8), 80 * 1024 * 1024),
    )


# ----------------------------------------------------------------------------
# Kernel 1: projection to head-major layout
#   x (B, T, K) @ Wt (K, N) + b  ->  out (B, H, T, Dh)   with N = H * Dh
# ----------------------------------------------------------------------------
def _proj_heads_kernel(x_ref, w_ref, b_ref, o_ref, acc_ref, *, heads_per_tile, dh):
    k = pl.program_id(3)

    @pl.when(k == 0)
    def _():
        acc_ref[...] = jnp.zeros_like(acc_ref)

    # Operands stay in the input dtype (bf16 stays bf16); f32 accumulation.
    acc_ref[...] += jnp.dot(x_ref[0], w_ref[...], preferred_element_type=jnp.float32)

    @pl.when(k == pl.num_programs(3) - 1)
    def _():
        y = acc_ref[...] + b_ref[...].astype(jnp.float32)       # (tt, tn)
        y = y.reshape(y.shape[0], heads_per_tile, dh)            # (tt, hpt, Dh)
        # One head-major transpose per output tile (only on the last K step);
        # the attention kernel then needs no transposes at all.
        o_ref[0] = jnp.transpose(y, (1, 0, 2)).astype(o_ref.dtype)


def project_to_heads(x, wt, bias, n_heads):
    """x: (B, T, K); wt: (K, N) pre-transposed; bias: (1, N) -> (B, H, T, Dh)."""
    B, T, K = x.shape
    N = wt.shape[1]
    H = n_heads
    Dh = N // H
    cfg = _chip_config()
    tt = _pick_tile(T, cfg["tm_cap"], 8)
    tk = _pick_tile(K, cfg["tk_cap"], 128)
    tn = _pick_tile(N, cfg["tn_cap"], lcm(128, Dh))   # tn is a multiple of Dh
    hpt = tn // Dh
    itemsize = jnp.dtype(x.dtype).itemsize
    kernel = functools.partial(_proj_heads_kernel, heads_per_tile=hpt, dh=Dh)
    return pl.pallas_call(
        kernel,
        out_shape=jax.ShapeDtypeStruct((B, H, T, Dh), x.dtype),
        grid_spec=pltpu.PrefetchScalarGridSpec(
            num_scalar_prefetch=0,
            grid=(B, T // tt, N // tn, K // tk),
            in_specs=[
                pl.BlockSpec((1, tt, tk), lambda b, i, j, k: (b, i, k)),
                pl.BlockSpec((tk, tn), lambda b, i, j, k: (k, j)),
                pl.BlockSpec((1, tn), lambda b, i, j, k: (0, j)),
            ],
            out_specs=pl.BlockSpec((1, hpt, tt, Dh), lambda b, i, j, k: (b, j, i, 0)),
            scratch_shapes=[pltpu.VMEM((tt, tn), jnp.float32)],
        ),
        compiler_params=pltpu.CompilerParams(
            dimension_semantics=("parallel", "parallel", "parallel", "arbitrary"),
            vmem_limit_bytes=cfg["vmem_limit"],
        ),
        cost_estimate=pl.CostEstimate(
            flops=2 * B * T * K * N,
            transcendentals=0,
            bytes_accessed=(B * T * K + K * N + N + B * T * N) * itemsize,
        ),
    )(x, wt, bias)


# ----------------------------------------------------------------------------
# Kernel 2: flash-style attention on head-major tensors (no transposes)
#   q (B, H, L, Dh), k/v (B, H, S, Dh) -> out (B, H, L, Dh)
#   The 1/sqrt(Dh) scale is already folded into the q projection.
# ----------------------------------------------------------------------------
def _flash_attention_kernel(q_ref, k_ref, v_ref, o_ref, m_sc, l_sc, acc_sc):
    j = pl.program_id(3)

    @pl.when(j == 0)
    def _():
        m_sc[...] = jnp.full_like(m_sc, -jnp.inf)
        l_sc[...] = jnp.zeros_like(l_sc)
        acc_sc[...] = jnp.zeros_like(acc_sc)

    q = q_ref[0, 0]                      # (tL, Dh), input dtype
    k = k_ref[0, 0]                      # (tS, Dh)
    # Contract over Dh; the "transposed" K operand is handled by the MXU
    # lowering -- no in-VMEM transpose, no dtype cast.
    s = lax.dot_general(q, k, (((1,), (1,)), ((), ())),
                        preferred_element_type=jnp.float32)      # (tL, tS) f32

    m_prev = m_sc[...]
    m_new = jnp.maximum(m_prev, jnp.max(s, axis=-1, keepdims=True))
    alpha = jnp.exp(m_prev - m_new)
    p = jnp.exp(s - m_new)                                        # (tL, tS) f32

    l_sc[...] = alpha * l_sc[...] + jnp.sum(p, axis=-1, keepdims=True)
    acc_sc[...] = alpha * acc_sc[...] + jnp.dot(
        p.astype(v_ref.dtype), v_ref[0, 0], preferred_element_type=jnp.float32)
    m_sc[...] = m_new

    @pl.when(j == pl.num_programs(3) - 1)
    def _():
        # Exact divide once per output tile keeps numerics tight.
        o_ref[0, 0] = (acc_sc[...] / l_sc[...]).astype(o_ref.dtype)


def flash_attention(q, k, v):
    B, H, L, Dh = q.shape
    S = k.shape[2]
    cfg = _chip_config()
    tL = _pick_tile(L, cfg["tl_cap"], 8)
    tS = _pick_tile(S, cfg["ts_cap"], 128 if S % 128 == 0 else 8)
    itemsize = jnp.dtype(q.dtype).itemsize
    return pl.pallas_call(
        _flash_attention_kernel,
        out_shape=jax.ShapeDtypeStruct((B, H, L, Dh), q.dtype),
        grid_spec=pltpu.PrefetchScalarGridSpec(
            num_scalar_prefetch=0,
            grid=(B, H, L // tL, S // tS),
            in_specs=[
                pl.BlockSpec((1, 1, tL, Dh), lambda b, h, i, j: (b, h, i, 0)),
                pl.BlockSpec((1, 1, tS, Dh), lambda b, h, i, j: (b, h, j, 0)),
                pl.BlockSpec((1, 1, tS, Dh), lambda b, h, i, j: (b, h, j, 0)),
            ],
            out_specs=pl.BlockSpec((1, 1, tL, Dh), lambda b, h, i, j: (b, h, i, 0)),
            scratch_shapes=[
                pltpu.VMEM((tL, 1), jnp.float32),    # running max
                pltpu.VMEM((tL, 1), jnp.float32),    # running denominator
                pltpu.VMEM((tL, Dh), jnp.float32),   # output accumulator
            ],
        ),
        compiler_params=pltpu.CompilerParams(
            dimension_semantics=("parallel", "parallel", "parallel", "arbitrary"),
            vmem_limit_bytes=cfg["vmem_limit"],
        ),
        cost_estimate=pl.CostEstimate(
            flops=4 * B * H * L * S * Dh,
            transcendentals=B * H * L * S,
            bytes_accessed=(2 * B * H * L * Dh + 2 * B * H * S * Dh) * itemsize,
        ),
    )(q, k, v)


# ----------------------------------------------------------------------------
# Kernel 3: output projection directly from head-major attention output
#   x (B, H, L, Dh) ; Wo_h (H, Dh, N) ; b (1, N)  ->  (B, L, N)
#   (reduction over heads as the last grid axis; no head-merge transpose)
# ----------------------------------------------------------------------------
def _merge_heads_proj_kernel(x_ref, w_ref, b_ref, o_ref, acc_ref):
    h = pl.program_id(3)

    @pl.when(h == 0)
    def _():
        acc_ref[...] = jnp.zeros_like(acc_ref)

    acc_ref[...] += jnp.dot(x_ref[0, 0], w_ref[0], preferred_element_type=jnp.float32)

    @pl.when(h == pl.num_programs(3) - 1)
    def _():
        o_ref[0] = (acc_ref[...] + b_ref[...].astype(jnp.float32)).astype(o_ref.dtype)


def merge_heads_project(x, w_h, bias):
    B, H, L, Dh = x.shape
    N = w_h.shape[2]
    cfg = _chip_config()
    tm = _pick_tile(L, cfg["tm_cap"], 8)
    tn = _pick_tile(N, cfg["tn_cap"], 128)
    itemsize = jnp.dtype(x.dtype).itemsize
    return pl.pallas_call(
        _merge_heads_proj_kernel,
        out_shape=jax.ShapeDtypeStruct((B, L, N), x.dtype),
        grid_spec=pltpu.PrefetchScalarGridSpec(
            num_scalar_prefetch=0,
            grid=(B, L // tm, N // tn, H),
            in_specs=[
                pl.BlockSpec((1, 1, tm, Dh), lambda b, i, j, h: (b, h, i, 0)),
                pl.BlockSpec((1, Dh, tn), lambda b, i, j, h: (h, 0, j)),
                pl.BlockSpec((1, tn), lambda b, i, j, h: (0, j)),
            ],
            out_specs=pl.BlockSpec((1, tm, tn), lambda b, i, j, h: (b, i, j)),
            scratch_shapes=[pltpu.VMEM((tm, tn), jnp.float32)],
        ),
        compiler_params=pltpu.CompilerParams(
            dimension_semantics=("parallel", "parallel", "parallel", "arbitrary"),
            vmem_limit_bytes=cfg["vmem_limit"],
        ),
        cost_estimate=pl.CostEstimate(
            flops=2 * B * L * H * Dh * N,
            transcendentals=0,
            bytes_accessed=(B * H * L * Dh + H * Dh * N + N + B * L * N) * itemsize,
        ),
    )(x, w_h, bias)


# ----------------------------------------------------------------------------
# AttentionLayer forward (all hot paths in Pallas kernels)
# ----------------------------------------------------------------------------
def prepare_params(raw, n_heads):
    """One-time layout prep (done at init, never per forward call)."""
    d_model = raw["q_w"].shape[0]
    H = n_heads
    Dh = d_model // H
    scale = 1.0 / sqrt(Dh)
    return {
        # softmax scale folded into the q projection (exact algebra, zero cost)
        "wq_t": (raw["q_w"] * scale).T,
        "bq": (raw["q_b"] * scale).reshape(1, d_model),
        "wk_t": raw["k_w"].T,
        "bk": raw["k_b"].reshape(1, d_model),
        "wv_t": raw["v_w"].T,
        "bv": raw["v_b"].reshape(1, d_model),
        # o_proj weight as (H, Dh, d_model): reduction split over (H, Dh)
        "wo_h": raw["o_w"].T.reshape(H, Dh, d_model),
        "bo": raw["o_b"].reshape(1, d_model),
    }


def attention_layer_forward(prep, q, k, v, n_heads):
    H = n_heads
    # TODO(synk): fuse the K and V (and Q for self-attention) projections into
    # one wider matmul when the input tensors alias; kept separate because the
    # module signature allows distinct q/k/v tensors (cross-attention).
    qh = project_to_heads(q, prep["wq_t"], prep["bq"], H)   # (B, H, L, Dh)
    kh = project_to_heads(k, prep["wk_t"], prep["bk"], H)   # (B, H, S, Dh)
    vh = project_to_heads(v, prep["wv_t"], prep["bv"], H)   # (B, H, S, Dh)
    oh = flash_attention(qh, kh, vh)                        # (B, H, L, Dh)
    return merge_heads_project(oh, prep["wo_h"], prep["bo"])  # (B, L, d_model)


def init_params(key, d_model):
    ks = jax.random.split(key, 8)
    bound = 1.0 / sqrt(d_model)

    def u(k, shape):
        return jax.random.uniform(k, shape, jnp.float32, -bound, bound)

    return {
        "q_w": u(ks[0], (d_model, d_model)), "q_b": u(ks[1], (d_model,)),
        "k_w": u(ks[2], (d_model, d_model)), "k_b": u(ks[3], (d_model,)),
        "v_w": u(ks[4], (d_model, d_model)), "v_b": u(ks[5], (d_model,)),
        "o_w": u(ks[6], (d_model, d_model)), "o_b": u(ks[7], (d_model,)),
    }


def reference_forward(params, q, k, v, n_heads):
    B, L, d_model = q.shape
    S = k.shape[1]
    H = n_heads
    Dh = d_model // H

    def lin(x, w, b):
        return x @ w.T + b

    qh = lin(q, params["q_w"], params["q_b"]).reshape(B, L, H, Dh)
    kh = lin(k, params["k_w"], params["k_b"]).reshape(B, S, H, Dh)
    vh = lin(v, params["v_w"], params["v_b"]).reshape(B, S, H, Dh)
    s = jnp.einsum("blhd,bshd->bhls", qh, kh) / sqrt(Dh)
    p = jax.nn.softmax(s, axis=-1)
    o = jnp.einsum("bhls,bshd->blhd", p, vh).reshape(B, L, d_model)
    return lin(o, params["o_w"], params["o_b"])


if __name__ == "__main__":
    key = jax.random.PRNGKey(0)
    kparam, kq, kk, kv = jax.random.split(key, 4)

    B, L, S, d_model, n_heads = 2, 8, 8, 32, 4
    raw_params = init_params(kparam, d_model)
    prep = prepare_params(raw_params, n_heads)   # one-time layout prep

    q = jax.random.normal(kq, (B, L, d_model), jnp.float32)
    k = jax.random.normal(kk, (B, S, d_model), jnp.float32)
    v = jax.random.normal(kv, (B, S, d_model), jnp.float32)

    fwd = jax.jit(functools.partial(attention_layer_forward, n_heads=n_heads))
    out = jax.block_until_ready(fwd(prep, q, k, v))

    ref = reference_forward(raw_params, q, k, v, n_heads)
    assert out.shape == (B, L, d_model)
    assert jnp.allclose(out, ref, atol=2e-3, rtol=2e-3), "mismatch vs reference"

    print("KERNEL_OK")
</pallas_src>

<mosaic_0001>
module attributes {stable_mosaic.version = 11 : i64} {
  func.func @_flash_attention_kernel(%arg0: i32, %arg1: i32, %arg2: i32, %arg3: i32, %arg4: memref<1x1x8x8xf32, #tpu.memory_space<vmem>>, %arg5: memref<1x1x8x8xf32, #tpu.memory_space<vmem>>, %arg6: memref<1x1x8x8xf32, #tpu.memory_space<vmem>>, %arg7: memref<1x1x8x8xf32, #tpu.memory_space<vmem>>, %arg8: memref<8x1xf32, #tpu.memory_space<vmem>>, %arg9: memref<8x1xf32, #tpu.memory_space<vmem>>, %arg10: memref<8x8xf32, #tpu.memory_space<vmem>>) attributes {dimension_semantics = [#tpu.dimension_semantics<parallel>, #tpu.dimension_semantics<parallel>, #tpu.dimension_semantics<parallel>, #tpu.dimension_semantics<arbitrary>], iteration_bounds = array<i64: 2, 4, 1, 1>, scalar_prefetch = 0 : i64, scratch_operands = 3 : i64, tpu.core_type = #tpu.core_type<tc>, window_params = [{transform_indices = @transform_0, window_bounds = array<i64: 1, 1, 8, 8>}, {transform_indices = @transform_1, window_bounds = array<i64: 1, 1, 8, 8>}, {transform_indices = @transform_2, window_bounds = array<i64: 1, 1, 8, 8>}, {transform_indices = @transform_3, window_bounds = array<i64: 1, 1, 8, 8>}]} {
    %c0_i32 = arith.constant 0 : i32
    %0 = arith.cmpi eq, %arg3, %c0_i32 : i32
    %1 = arith.extui %0 : i1 to i32
    %c0_i32_0 = arith.constant 0 : i32
    %2 = arith.cmpi ne, %1, %c0_i32_0 : i32
    scf.if %2 {
      %cst_29 = arith.constant 0xFF800000 : f32
      %35 = vector.broadcast %cst_29 : f32 to vector<8x1xf32>
      %c0_30 = arith.constant 0 : index
      %c0_31 = arith.constant 0 : index
      %36 = vector.load %arg8[%c0_30, %c0_31] : memref<8x1xf32, #tpu.memory_space<vmem>>, vector<8x1xf32>
      tpu.vector_store %arg8[%c0_30, %c0_31], %35 {strides = array<i32>} : memref<8x1xf32, #tpu.memory_space<vmem>>, vector<8x1xf32>,
      %cst_32 = arith.constant 0.000000e+00 : f32
      %37 = vector.broadcast %cst_32 : f32 to vector<8x1xf32>
      %c0_33 = arith.constant 0 : index
      %c0_34 = arith.constant 0 : index
      %38 = vector.load %arg9[%c0_33, %c0_34] : memref<8x1xf32, #tpu.memory_space<vmem>>, vector<8x1xf32>
      tpu.vector_store %arg9[%c0_33, %c0_34], %37 {strides = array<i32>} : memref<8x1xf32, #tpu.memory_space<vmem>>, vector<8x1xf32>,
      %cst_35 = arith.constant 0.000000e+00 : f32
      %39 = vector.broadcast %cst_35 : f32 to vector<8x8xf32>
      %c0_36 = arith.constant 0 : index
      %c0_37 = arith.constant 0 : index
      %40 = vector.load %arg10[%c0_36, %c0_37] : memref<8x8xf32, #tpu.memory_space<vmem>>, vector<8x8xf32>
      tpu.vector_store %arg10[%c0_36, %c0_37], %39 {strides = array<i32>} : memref<8x8xf32, #tpu.memory_space<vmem>>, vector<8x8xf32>,
    } else {
    }
    %c0 = arith.constant 0 : index
    %c0_1 = arith.constant 0 : index
    %c0_2 = arith.constant 0 : index
    %c0_3 = arith.constant 0 : index
    %3 = vector.load %arg4[%c0, %c0_1, %c0_2, %c0_3] : memref<1x1x8x8xf32, #tpu.memory_space<vmem>>, vector<1x1x8x8xf32>
    %4 = vector.shape_cast %3 : vector<1x1x8x8xf32> to vector<8x8xf32>
    %c0_4 = arith.constant 0 : index
    %c0_5 = arith.constant 0 : index
    %c0_6 = arith.constant 0 : index
    %c0_7 = arith.constant 0 : index
    %5 = vector.load %arg5[%c0_4, %c0_5, %c0_6, %c0_7] : memref<1x1x8x8xf32, #tpu.memory_space<vmem>>, vector<1x1x8x8xf32>
    %6 = vector.shape_cast %5 : vector<1x1x8x8xf32> to vector<8x8xf32>
    %cst = arith.constant dense<0.000000e+00> : vector<8x8xf32>
    %7 = tpu.matmul %4, %6, %cst {dimension_numbers = #tpu.dot_dimension_numbers<[1], [1], [0], [0], [0, 0, 1, 0], [], []>} : vector<8x8xf32>, vector<8x8xf32>, vector<8x8xf32> -> vector<8x8xf32>
    %c0_8 = arith.constant 0 : index
    %c0_9 = arith.constant 0 : index
    %8 = vector.load %arg8[%c0_8, %c0_9] : memref<8x1xf32, #tpu.memory_space<vmem>>, vector<8x1xf32>
    %cst_10 = arith.constant dense<0xFF800000> : vector<8xf32>
    %9 = vector.multi_reduction <maximumf>, %7, %cst_10 [1] : vector<8x8xf32> to vector<8xf32>
    %10 = vector.shape_cast %9 : vector<8xf32> to vector<8x1xf32>
    %11 = arith.maximumf %8, %10 : vector<8x1xf32>
    %12 = arith.subf %8, %11 : vector<8x1xf32>
    %13 = math.exp %12 : vector<8x1xf32>
    %14 = vector.broadcast %11 : vector<8x1xf32> to vector<8x8xf32>
    %15 = arith.subf %7, %14 : vector<8x8xf32>
    %16 = math.exp %15 : vector<8x8xf32>
    %c0_11 = arith.constant 0 : index
    %c0_12 = arith.constant 0 : index
    %17 = vector.load %arg9[%c0_11, %c0_12] : memref<8x1xf32, #tpu.memory_space<vmem>>, vector<8x1xf32>
    %18 = arith.mulf %13, %17 : vector<8x1xf32>
    %cst_13 = arith.constant dense<0.000000e+00> : vector<8xf32>
    %19 = vector.multi_reduction <add>, %16, %cst_13 [1] : vector<8x8xf32> to vector<8xf32>
    %20 = vector.shape_cast %19 : vector<8xf32> to vector<8x1xf32>
    %21 = arith.addf %18, %20 : vector<8x1xf32>
    %c0_14 = arith.constant 0 : index
    %c0_15 = arith.constant 0 : index
    %22 = vector.load %arg9[%c0_14, %c0_15] : memref<8x1xf32, #tpu.memory_space<vmem>>, vector<8x1xf32>
    tpu.vector_store %arg9[%c0_14, %c0_15], %21 {strides = array<i32>} : memref<8x1xf32, #tpu.memory_space<vmem>>, vector<8x1xf32>,
    %c0_16 = arith.constant 0 : index
    %c0_17 = arith.constant 0 : index
    %23 = vector.load %arg10[%c0_16, %c0_17] : memref<8x8xf32, #tpu.memory_space<vmem>>, vector<8x8xf32>
    %24 = vector.broadcast %13 : vector<8x1xf32> to vector<8x8xf32>
    %25 = arith.mulf %24, %23 : vector<8x8xf32>
    %c0_18 = arith.constant 0 : index
    %c0_19 = arith.constant 0 : index
    %c0_20 = arith.constant 0 : index
    %c0_21 = arith.constant 0 : index
    %26 = vector.load %arg6[%c0_18, %c0_19, %c0_20, %c0_21] : memref<1x1x8x8xf32, #tpu.memory_space<vmem>>, vector<1x1x8x8xf32>
    %27 = vector.shape_cast %26 : vector<1x1x8x8xf32> to vector<8x8xf32>
    %cst_22 = arith.constant dense<0.000000e+00> : vector<8x8xf32>
    %28 = tpu.matmul %16, %27, %cst_22 {dimension_numbers = #tpu.dot_dimension_numbers<[1], [0], [0], [1], [0, 0, 1, 1], [], []>} : vector<8x8xf32>, vector<8x8xf32>, vector<8x8xf32> -> vector<8x8xf32>
    %29 = arith.addf %25, %28 : vector<8x8xf32>
    %c0_23 = arith.constant 0 : index
    %c0_24 = arith.constant 0 : index
    %30 = vector.load %arg10[%c0_23, %c0_24] : memref<8x8xf32, #tpu.memory_space<vmem>>, vector<8x8xf32>
    tpu.vector_store %arg10[%c0_23, %c0_24], %29 {strides = array<i32>} : memref<8x8xf32, #tpu.memory_space<vmem>>, vector<8x8xf32>,
    %c0_25 = arith.constant 0 : index
    %c0_26 = arith.constant 0 : index
    %31 = vector.load %arg8[%c0_25, %c0_26] : memref<8x1xf32, #tpu.memory_space<vmem>>, vector<8x1xf32>
    tpu.vector_store %arg8[%c0_25, %c0_26], %11 {strides = array<i32>} : memref<8x1xf32, #tpu.memory_space<vmem>>, vector<8x1xf32>,
    %c0_i32_27 = arith.constant 0 : i32
    %32 = arith.cmpi eq, %arg3, %c0_i32_27 : i32
    %33 = arith.extui %32 : i1 to i32
    %c0_i32_28 = arith.constant 0 : i32
    %34 = arith.cmpi ne, %33, %c0_i32_28 : i32
    scf.if %34 {
      %c0_29 = arith.constant 0 : index
      %c0_30 = arith.constant 0 : index
      %35 = vector.load %arg10[%c0_29, %c0_30] : memref<8x8xf32, #tpu.memory_space<vmem>>, vector<8x8xf32>
      %c0_31 = arith.constant 0 : index
      %c0_32 = arith.constant 0 : index
      %36 = vector.load %arg9[%c0_31, %c0_32] : memref<8x1xf32, #tpu.memory_space<vmem>>, vector<8x1xf32>
      %37 = vector.broadcast %36 : vector<8x1xf32> to vector<8x8xf32>
      %38 = arith.divf %35, %37 : vector<8x8xf32>
      %c0_33 = arith.constant 0 : index
      %c0_34 = arith.constant 0 : index
      %c0_35 = arith.constant 0 : index
      %c0_36 = arith.constant 0 : index
      %39 = vector.load %arg7[%c0_33, %c0_34, %c0_35, %c0_36] : memref<1x1x8x8xf32, #tpu.memory_space<vmem>>, vector<1x1x8x8xf32>
      %40 = vector.shape_cast %39 : vector<1x1x8x8xf32> to vector<8x8xf32>
      %41 = vector.shape_cast %38 : vector<8x8xf32> to vector<1x1x8x8xf32>
      tpu.vector_store %arg7[%c0_33, %c0_34, %c0_35, %c0_36], %41 {strides = array<i32>} : memref<1x1x8x8xf32, #tpu.memory_space<vmem>>, vector<1x1x8x8xf32>,
    } else {
    }
    return
  }
  func.func @transform_0(%arg0: i32, %arg1: i32, %arg2: i32, %arg3: i32) -> (i32, i32, i32, i32) {
    %c0_i32 = arith.constant 0 : i32
    %c0_i32_0 = arith.constant 0 : i32
    return %arg0, %arg1, %arg2, %c0_i32 : i32, i32, i32, i32
  }
  func.func @transform_1(%arg0: i32, %arg1: i32, %arg2: i32, %arg3: i32) -> (i32, i32, i32, i32) {
    %c0_i32 = arith.constant 0 : i32
    %c0_i32_0 = arith.constant 0 : i32
    return %arg0, %arg1, %arg3, %c0_i32 : i32, i32, i32, i32
  }
  func.func @transform_2(%arg0: i32, %arg1: i32, %arg2: i32, %arg3: i32) -> (i32, i32, i32, i32) {
    %c0_i32 = arith.constant 0 : i32
    %c0_i32_0 = arith.constant 0 : i32
    return %arg0, %arg1, %arg3, %c0_i32 : i32, i32, i32, i32
  }
  func.func @transform_3(%arg0: i32, %arg1: i32, %arg2: i32, %arg3: i32) -> (i32, i32, i32, i32) {
    %c0_i32 = arith.constant 0 : i32
    %c0_i32_0 = arith.constant 0 : i32
    return %arg0, %arg1, %arg2, %c0_i32 : i32, i32, i32, i32
  }
}

module attributes {stable_mosaic.version = 11 : i64} {
  func.func @_proj_heads_kernel(%arg0: i32, %arg1: i32, %arg2: i32, %arg3: i32, %arg4: memref<1x8x32xf32, #tpu.memory_space<vmem>>, %arg5: memref<32x32xf32, #tpu.memory_space<vmem>>, %arg6: memref<1x32xf32, #tpu.memory_space<vmem>>, %arg7: memref<1x4x8x8xf32, #tpu.memory_space<vmem>>, %arg8: memref<8x32xf32, #tpu.memory_space<vmem>>) attributes {dimension_semantics = [#tpu.dimension_semantics<parallel>, #tpu.dimension_semantics<parallel>, #tpu.dimension_semantics<parallel>, #tpu.dimension_semantics<arbitrary>], iteration_bounds = array<i64: 2, 1, 1, 1>, scalar_prefetch = 0 : i64, scratch_operands = 1 : i64, tpu.core_type = #tpu.core_type<tc>, window_params = [{transform_indices = @transform_0, window_bounds = array<i64: 1, 8, 32>}, {transform_indices = @transform_1, window_bounds = array<i64: 32, 32>}, {transform_indices = @transform_2, window_bounds = array<i64: 1, 32>}, {transform_indices = @transform_3, window_bounds = array<i64: 1, 4, 8, 8>}]} {
    %c0_i32 = arith.constant 0 : i32
    %0 = arith.cmpi eq, %arg3, %c0_i32 : i32
    %1 = arith.extui %0 : i1 to i32
    %c0_i32_0 = arith.constant 0 : i32
    %2 = arith.cmpi ne, %1, %c0_i32_0 : i32
    scf.if %2 {
      %cst_11 = arith.constant 0.000000e+00 : f32
      %13 = vector.broadcast %cst_11 : f32 to vector<8x32xf32>
      %c0_12 = arith.constant 0 : index
      %c0_13 = arith.constant 0 : index
      %14 = vector.load %arg8[%c0_12, %c0_13] : memref<8x32xf32, #tpu.memory_space<vmem>>, vector<8x32xf32>
      tpu.vector_store %arg8[%c0_12, %c0_13], %13 {strides = array<i32>} : memref<8x32xf32, #tpu.memory_space<vmem>>, vector<8x32xf32>,
    } else {
    }
    %c0 = arith.constant 0 : index
    %c0_1 = arith.constant 0 : index
    %3 = vector.load %arg8[%c0, %c0_1] : memref<8x32xf32, #tpu.memory_space<vmem>>, vector<8x32xf32>
    %c0_2 = arith.constant 0 : index
    %c0_3 = arith.constant 0 : index
    %c0_4 = arith.constant 0 : index
    %4 = vector.load %arg4[%c0_2, %c0_3, %c0_4] : memref<1x8x32xf32, #tpu.memory_space<vmem>>, vector<1x8x32xf32>
    %5 = vector.shape_cast %4 : vector<1x8x32xf32> to vector<8x32xf32>
    %c0_5 = arith.constant 0 : index
    %c0_6 = arith.constant 0 : index
    %6 = vector.load %arg5[%c0_5, %c0_6] : memref<32x32xf32, #tpu.memory_space<vmem>>, vector<32x32xf32>
    %cst = arith.constant dense<0.000000e+00> : vector<8x32xf32>
    %7 = tpu.matmul %5, %6, %cst {dimension_numbers = #tpu.dot_dimension_numbers<[1], [0], [0], [1], [0, 0, 1, 1], [], []>} : vector<8x32xf32>, vector<32x32xf32>, vector<8x32xf32> -> vector<8x32xf32>
    %8 = arith.addf %3, %7 : vector<8x32xf32>
    %c0_7 = arith.constant 0 : index
    %c0_8 = arith.constant 0 : index
    %9 = vector.load %arg8[%c0_7, %c0_8] : memref<8x32xf32, #tpu.memory_space<vmem>>, vector<8x32xf32>
    tpu.vector_store %arg8[%c0_7, %c0_8], %8 {strides = array<i32>} : memref<8x32xf32, #tpu.memory_space<vmem>>, vector<8x32xf32>,
    %c0_i32_9 = arith.constant 0 : i32
    %10 = arith.cmpi eq, %arg3, %c0_i32_9 : i32
    %11 = arith.extui %10 : i1 to i32
    %c0_i32_10 = arith.constant 0 : i32
    %12 = arith.cmpi ne, %11, %c0_i32_10 : i32
    scf.if %12 {
      %c0_11 = arith.constant 0 : index
      %c0_12 = arith.constant 0 : index
      %13 = vector.load %arg8[%c0_11, %c0_12] : memref<8x32xf32, #tpu.memory_space<vmem>>, vector<8x32xf32>
      %c0_13 = arith.constant 0 : index
      %c0_14 = arith.constant 0 : index
      %14 = vector.load %arg6[%c0_13, %c0_14] : memref<1x32xf32, #tpu.memory_space<vmem>>, vector<1x32xf32>
      %15 = vector.broadcast %14 : vector<1x32xf32> to vector<8x32xf32>
      %16 = arith.addf %13, %15 : vector<8x32xf32>
      %17 = vector.shape_cast %16 : vector<8x32xf32> to vector<8x4x8xf32>
      %18 = tpu.transpose %17, [1, 0, 2] : vector<8x4x8xf32> -> vector<4x8x8xf32>
      %c0_15 = arith.constant 0 : index
      %c0_16 = arith.constant 0 : index
      %c0_17 = arith.constant 0 : index
      %c0_18 = arith.constant 0 : index
      %19 = vector.load %arg7[%c0_15, %c0_16, %c0_17, %c0_18] : memref<1x4x8x8xf32, #tpu.memory_space<vmem>>, vector<1x4x8x8xf32>
      %20 = vector.shape_cast %19 : vector<1x4x8x8xf32> to vector<4x8x8xf32>
      %21 = vector.shape_cast %18 : vector<4x8x8xf32> to vector<1x4x8x8xf32>
      tpu.vector_store %arg7[%c0_15, %c0_16, %c0_17, %c0_18], %21 {strides = array<i32>} : memref<1x4x8x8xf32, #tpu.memory_space<vmem>>, vector<1x4x8x8xf32>,
    } else {
    }
    return
  }
  func.func @transform_0(%arg0: i32, %arg1: i32, %arg2: i32, %arg3: i32) -> (i32, i32, i32) {
    %c0_i32 = arith.constant 0 : i32
    return %arg0, %arg1, %arg3 : i32, i32, i32
  }
  func.func @transform_1(%arg0: i32, %arg1: i32, %arg2: i32, %arg3: i32) -> (i32, i32) {
    %c0_i32 = arith.constant 0 : i32
    return %arg3, %arg2 : i32, i32
  }
  func.func @transform_2(%arg0: i32, %arg1: i32, %arg2: i32, %arg3: i32) -> (i32, i32) {
    %c0_i32 = arith.constant 0 : i32
    %c0_i32_0 = arith.constant 0 : i32
    return %c0_i32, %arg2 : i32, i32
  }
  func.func @transform_3(%arg0: i32, %arg1: i32, %arg2: i32, %arg3: i32) -> (i32, i32, i32, i32) {
    %c0_i32 = arith.constant 0 : i32
    %c0_i32_0 = arith.constant 0 : i32
    return %arg0, %arg2, %arg1, %c0_i32 : i32, i32, i32, i32
  }
}

module attributes {stable_mosaic.version = 11 : i64} {
  func.func @_merge_heads_proj_kernel(%arg0: i32, %arg1: i32, %arg2: i32, %arg3: i32, %arg4: memref<1x1x8x8xf32, #tpu.memory_space<vmem>>, %arg5: memref<1x8x32xf32, #tpu.memory_space<vmem>>, %arg6: memref<1x32xf32, #tpu.memory_space<vmem>>, %arg7: memref<1x8x32xf32, #tpu.memory_space<vmem>>, %arg8: memref<8x32xf32, #tpu.memory_space<vmem>>) attributes {dimension_semantics = [#tpu.dimension_semantics<parallel>, #tpu.dimension_semantics<parallel>, #tpu.dimension_semantics<parallel>, #tpu.dimension_semantics<arbitrary>], iteration_bounds = array<i64: 2, 1, 1, 4>, scalar_prefetch = 0 : i64, scratch_operands = 1 : i64, tpu.core_type = #tpu.core_type<tc>, window_params = [{transform_indices = @transform_0, window_bounds = array<i64: 1, 1, 8, 8>}, {transform_indices = @transform_1, window_bounds = array<i64: 1, 8, 32>}, {transform_indices = @transform_2, window_bounds = array<i64: 1, 32>}, {transform_indices = @transform_3, window_bounds = array<i64: 1, 8, 32>}]} {
    %c0_i32 = arith.constant 0 : i32
    %0 = arith.cmpi eq, %arg3, %c0_i32 : i32
    %1 = arith.extui %0 : i1 to i32
    %c0_i32_0 = arith.constant 0 : i32
    %2 = arith.cmpi ne, %1, %c0_i32_0 : i32
    scf.if %2 {
      %cst_12 = arith.constant 0.000000e+00 : f32
      %14 = vector.broadcast %cst_12 : f32 to vector<8x32xf32>
      %c0_13 = arith.constant 0 : index
      %c0_14 = arith.constant 0 : index
      %15 = vector.load %arg8[%c0_13, %c0_14] : memref<8x32xf32, #tpu.memory_space<vmem>>, vector<8x32xf32>
      tpu.vector_store %arg8[%c0_13, %c0_14], %14 {strides = array<i32>} : memref<8x32xf32, #tpu.memory_space<vmem>>, vector<8x32xf32>,
    } else {
    }
    %c0 = arith.constant 0 : index
    %c0_1 = arith.constant 0 : index
    %3 = vector.load %arg8[%c0, %c0_1] : memref<8x32xf32, #tpu.memory_space<vmem>>, vector<8x32xf32>
    %c0_2 = arith.constant 0 : index
    %c0_3 = arith.constant 0 : index
    %c0_4 = arith.constant 0 : index
    %c0_5 = arith.constant 0 : index
    %4 = vector.load %arg4[%c0_2, %c0_3, %c0_4, %c0_5] : memref<1x1x8x8xf32, #tpu.memory_space<vmem>>, vector<1x1x8x8xf32>
    %5 = vector.shape_cast %4 : vector<1x1x8x8xf32> to vector<8x8xf32>
    %c0_6 = arith.constant 0 : index
    %c0_7 = arith.constant 0 : index
    %c0_8 = arith.constant 0 : index
    %6 = vector.load %arg5[%c0_6, %c0_7, %c0_8] : memref<1x8x32xf32, #tpu.memory_space<vmem>>, vector<1x8x32xf32>
    %7 = vector.shape_cast %6 : vector<1x8x32xf32> to vector<8x32xf32>
    %cst = arith.constant dense<0.000000e+00> : vector<8x32xf32>
    %8 = tpu.matmul %5, %7, %cst {dimension_numbers = #tpu.dot_dimension_numbers<[1], [0], [0], [1], [0, 0, 1, 1], [], []>} : vector<8x8xf32>, vector<8x32xf32>, vector<8x32xf32> -> vector<8x32xf32>
    %9 = arith.addf %3, %8 : vector<8x32xf32>
    %c0_9 = arith.constant 0 : index
    %c0_10 = arith.constant 0 : index
    %10 = vector.load %arg8[%c0_9, %c0_10] : memref<8x32xf32, #tpu.memory_space<vmem>>, vector<8x32xf32>
    tpu.vector_store %arg8[%c0_9, %c0_10], %9 {strides = array<i32>} : memref<8x32xf32, #tpu.memory_space<vmem>>, vector<8x32xf32>,
    %c3_i32 = arith.constant 3 : i32
    %11 = arith.cmpi eq, %arg3, %c3_i32 : i32
    %12 = arith.extui %11 : i1 to i32
    %c0_i32_11 = arith.constant 0 : i32
    %13 = arith.cmpi ne, %12, %c0_i32_11 : i32
    scf.if %13 {
      %c0_12 = arith.constant 0 : index
      %c0_13 = arith.constant 0 : index
      %14 = vector.load %arg8[%c0_12, %c0_13] : memref<8x32xf32, #tpu.memory_space<vmem>>, vector<8x32xf32>
      %c0_14 = arith.constant 0 : index
      %c0_15 = arith.constant 0 : index
      %15 = vector.load %arg6[%c0_14, %c0_15] : memref<1x32xf32, #tpu.memory_space<vmem>>, vector<1x32xf32>
      %16 = vector.broadcast %15 : vector<1x32xf32> to vector<8x32xf32>
      %17 = arith.addf %14, %16 : vector<8x32xf32>
      %c0_16 = arith.constant 0 : index
      %c0_17 = arith.constant 0 : index
      %c0_18 = arith.constant 0 : index
      %18 = vector.load %arg7[%c0_16, %c0_17, %c0_18] : memref<1x8x32xf32, #tpu.memory_space<vmem>>, vector<1x8x32xf32>
      %19 = vector.shape_cast %18 : vector<1x8x32xf32> to vector<8x32xf32>
      %20 = vector.shape_cast %17 : vector<8x32xf32> to vector<1x8x32xf32>
      tpu.vector_store %arg7[%c0_16, %c0_17, %c0_18], %20 {strides = array<i32>} : memref<1x8x32xf32, #tpu.memory_space<vmem>>, vector<1x8x32xf32>,
    } else {
    }
    return
  }
  func.func @transform_0(%arg0: i32, %arg1: i32, %arg2: i32, %arg3: i32) -> (i32, i32, i32, i32) {
    %c0_i32 = arith.constant 0 : i32
    %c0_i32_0 = arith.constant 0 : i32
    return %arg0, %arg3, %arg1, %c0_i32 : i32, i32, i32, i32
  }
  func.func @transform_1(%arg0: i32, %arg1: i32, %arg2: i32, %arg3: i32) -> (i32, i32, i32) {
    %c0_i32 = arith.constant 0 : i32
    %c0_i32_0 = arith.constant 0 : i32
    return %arg3, %c0_i32, %arg2 : i32, i32, i32
  }
  func.func @transform_2(%arg0: i32, %arg1: i32, %arg2: i32, %arg3: i32) -> (i32, i32) {
    %c0_i32 = arith.constant 0 : i32
    %c0_i32_0 = arith.constant 0 : i32
    return %c0_i32, %arg2 : i32, i32
  }
  func.func @transform_3(%arg0: i32, %arg1: i32, %arg2: i32, %arg3: i32) -> (i32, i32, i32) {
    %c0_i32 = arith.constant 0 : i32
    return %arg0, %arg1, %arg2 : i32, i32, i32
  }
}

module attributes {stable_mosaic.version = 11 : i64} {
  func.func @_proj_heads_kernel(%arg0: i32, %arg1: i32, %arg2: i32, %arg3: i32, %arg4: memref<1x8x32xf32, #tpu.memory_space<vmem>>, %arg5: memref<32x32xf32, #tpu.memory_space<vmem>>, %arg6: memref<1x32xf32, #tpu.memory_space<vmem>>, %arg7: memref<1x4x8x8xf32, #tpu.memory_space<vmem>>, %arg8: memref<8x32xf32, #tpu.memory_space<vmem>>) attributes {dimension_semantics = [#tpu.dimension_semantics<parallel>, #tpu.dimension_semantics<parallel>, #tpu.dimension_semantics<parallel>, #tpu.dimension_semantics<arbitrary>], iteration_bounds = array<i64: 2, 1, 1, 1>, scalar_prefetch = 0 : i64, scratch_operands = 1 : i64, tpu.core_type = #tpu.core_type<tc>, window_params = [{transform_indices = @transform_0, window_bounds = array<i64: 1, 8, 32>}, {transform_indices = @transform_1, window_bounds = array<i64: 32, 32>}, {transform_indices = @transform_2, window_bounds = array<i64: 1, 32>}, {transform_indices = @transform_3, window_bounds = array<i64: 1, 4, 8, 8>}]} {
    %c0_i32 = arith.constant 0 : i32
    %0 = arith.cmpi eq, %arg3, %c0_i32 : i32
    %1 = arith.extui %0 : i1 to i32
    %c0_i32_0 = arith.constant 0 : i32
    %2 = arith.cmpi ne, %1, %c0_i32_0 : i32
    scf.if %2 {
      %cst_11 = arith.constant 0.000000e+00 : f32
      %13 = vector.broadcast %cst_11 : f32 to vector<8x32xf32>
      %c0_12 = arith.constant 0 : index
      %c0_13 = arith.constant 0 : index
      %14 = vector.load %arg8[%c0_12, %c0_13] : memref<8x32xf32, #tpu.memory_space<vmem>>, vector<8x32xf32>
      tpu.vector_store %arg8[%c0_12, %c0_13], %13 {strides = array<i32>} : memref<8x32xf32, #tpu.memory_space<vmem>>, vector<8x32xf32>,
    } else {
    }
    %c0 = arith.constant 0 : index
    %c0_1 = arith.constant 0 : index
    %3 = vector.load %arg8[%c0, %c0_1] : memref<8x32xf32, #tpu.memory_space<vmem>>, vector<8x32xf32>
    %c0_2 = arith.constant 0 : index
    %c0_3 = arith.constant 0 : index
    %c0_4 = arith.constant 0 : index
    %4 = vector.load %arg4[%c0_2, %c0_3, %c0_4] : memref<1x8x32xf32, #tpu.memory_space<vmem>>, vector<1x8x32xf32>
    %5 = vector.shape_cast %4 : vector<1x8x32xf32> to vector<8x32xf32>
    %c0_5 = arith.constant 0 : index
    %c0_6 = arith.constant 0 : index
    %6 = vector.load %arg5[%c0_5, %c0_6] : memref<32x32xf32, #tpu.memory_space<vmem>>, vector<32x32xf32>
    %cst = arith.constant dense<0.000000e+00> : vector<8x32xf32>
    %7 = tpu.matmul %5, %6, %cst {dimension_numbers = #tpu.dot_dimension_numbers<[1], [0], [0], [1], [0, 0, 1, 1], [], []>} : vector<8x32xf32>, vector<32x32xf32>, vector<8x32xf32> -> vector<8x32xf32>
    %8 = arith.addf %3, %7 : vector<8x32xf32>
    %c0_7 = arith.constant 0 : index
    %c0_8 = arith.constant 0 : index
    %9 = vector.load %arg8[%c0_7, %c0_8] : memref<8x32xf32, #tpu.memory_space<vmem>>, vector<8x32xf32>
    tpu.vector_store %arg8[%c0_7, %c0_8], %8 {strides = array<i32>} : memref<8x32xf32, #tpu.memory_space<vmem>>, vector<8x32xf32>,
    %c0_i32_9 = arith.constant 0 : i32
    %10 = arith.cmpi eq, %arg3, %c0_i32_9 : i32
    %11 = arith.extui %10 : i1 to i32
    %c0_i32_10 = arith.constant 0 : i32
    %12 = arith.cmpi ne, %11, %c0_i32_10 : i32
    scf.if %12 {
      %c0_11 = arith.constant 0 : index
      %c0_12 = arith.constant 0 : index
      %13 = vector.load %arg8[%c0_11, %c0_12] : memref<8x32xf32, #tpu.memory_space<vmem>>, vector<8x32xf32>
      %c0_13 = arith.constant 0 : index
      %c0_14 = arith.constant 0 : index
      %14 = vector.load %arg6[%c0_13, %c0_14] : memref<1x32xf32, #tpu.memory_space<vmem>>, vector<1x32xf32>
      %15 = vector.broadcast %14 : vector<1x32xf32> to vector<8x32xf32>
      %16 = arith.addf %13, %15 : vector<8x32xf32>
      %17 = vector.shape_cast %16 : vector<8x32xf32> to vector<8x4x8xf32>
      %18 = tpu.transpose %17, [1, 0, 2] : vector<8x4x8xf32> -> vector<4x8x8xf32>
      %c0_15 = arith.constant 0 : index
      %c0_16 = arith.constant 0 : index
      %c0_17 = arith.constant 0 : index
      %c0_18 = arith.constant 0 : index
      %19 = vector.load %arg7[%c0_15, %c0_16, %c0_17, %c0_18] : memref<1x4x8x8xf32, #tpu.memory_space<vmem>>, vector<1x4x8x8xf32>
      %20 = vector.shape_cast %19 : vector<1x4x8x8xf32> to vector<4x8x8xf32>
      %21 = vector.shape_cast %18 : vector<4x8x8xf32> to vector<1x4x8x8xf32>
      tpu.vector_store %arg7[%c0_15, %c0_16, %c0_17, %c0_18], %21 {strides = array<i32>} : memref<1x4x8x8xf32, #tpu.memory_space<vmem>>, vector<1x4x8x8xf32>,
    } else {
    }
    return
  }
  func.func @transform_0(%arg0: i32, %arg1: i32, %arg2: i32, %arg3: i32) -> (i32, i32, i32) {
    %c0_i32 = arith.constant 0 : i32
    return %arg0, %arg1, %arg3 : i32, i32, i32
  }
  func.func @transform_1(%arg0: i32, %arg1: i32, %arg2: i32, %arg3: i32) -> (i32, i32) {
    %c0_i32 = arith.constant 0 : i32
    return %arg3, %arg2 : i32, i32
  }
  func.func @transform_2(%arg0: i32, %arg1: i32, %arg2: i32, %arg3: i32) -> (i32, i32) {
    %c0_i32 = arith.constant 0 : i32
    %c0_i32_0 = arith.constant 0 : i32
    return %c0_i32, %arg2 : i32, i32
  }
  func.func @transform_3(%arg0: i32, %arg1: i32, %arg2: i32, %arg3: i32) -> (i32, i32, i32, i32) {
    %c0_i32 = arith.constant 0 : i32
    %c0_i32_0 = arith.constant 0 : i32
    return %arg0, %arg2, %arg1, %c0_i32 : i32, i32, i32, i32
  }
}

</mosaic_0001>

<llo_original>
// kernel: attention_layer_forward.9
$region0: #{attention_layer_forward.9}
  #allocation0 [shape = 'u32[]', space=smem, size = 0x4, offset = 0x4, fixed_abs, tag = 'smem constant byte address 0x4 - core index']
  #allocation1 [shape = 'u32[144,128]{1,0:T(1,128)}', space=vmem, size = 0x12000, scoped, tag = 'internal scratch']
  #allocation2 [shape = 'f32[8,32]{1,0:T(8,128)}', space=vmem, size = 0x1000, scoped, tag = 'scratch operand']
  %s0 = inlined_call_operand.vmem [shape: f32[2,4,8,8], index: 0, kind: input, shape index: {}]
  %s1 = inlined_call_operand.vmem [shape: f32[4,8,32], index: 1, kind: input, shape index: {}]
  %s2 = inlined_call_operand.vmem [shape: f32[1,32], index: 2, kind: input, shape index: {}]
  %s3 = inlined_call_operand.hbm [shape: f32[2,8,32], index: 3, kind: output, shape index: {}]
  %s4 = sld [smem:[#allocation0]]
  $region53: #{attention_layer_forward.9} parent=0
    _
  %s6 = ssub.s32 1, %s4
  %s7 = scalar_select 0, %s6, %s4
  $region1: #{attention_layer_forward.9} parent=0
    #allocation3 [shape = 'u8[8192]{0}', space=vmem, size = 0x2000, scoped, tag = 'output window, operand 0']
    #allocation4 [shape = 's32[2]{0}', space=sflag, size = 0x8, scoped, tag = 'scoped memory for attention_layer_forward.9']
    %8 = vsyncpa [#allocation4], 0
    %s9 = scalar_lea.sflag [#allocation4], 1
    %10 = vsyncpa %s9, 0
    loop: start=0, step=1, limit=10
    $region2: #{attention_layer_forward.9} parent=1 // loop_pre_header
      _
    $region3: #{attention_layer_forward.9} parent=1 // loop_header
      %s12 = sphi 0, %s16
      %p13 = scmp.ge.s32.totalorder %s12, 10
      %s19 = sphi 0, %s45
      %s20 = sphi 0, %s41
      %s21 = sphi 0, %s37
      %s22 = sphi 0, %s33
      %s23 = sphi 0, %s19
      %s24 = sphi 0, %s20
      %s25 = sphi 0, %s21
      %s26 = sphi 0, %s22
      %s27 = sphi 0, %s23
      %s28 = sphi 0, %s24
      %s29 = sphi 0, %s25
      %s30 = sphi 0, %s26
      %s52 = sphi 0, %s54
      %s55 = sphi 0, %s52
      %s56 = sphi 0, %s55
      %s72 = sphi 0, %s56
      %s80 = sphi 0, %s82
      %s83 = sphi 0, %s80
      %s84 = sphi 0, %s83
      %s100 = sphi 0, %s84
      %s106 = sphi 0, %s108
      %s109 = sphi 0, %s106
      %s110 = sphi 0, %s109
      %s126 = sphi 0, %s110
      %s136 = sphi 0, %s138
      %s139 = sphi 0, %s136
      %s140 = sphi 0, %s139
      %s156 = sphi 0, %s140
    $region4: #{attention_layer_forward.9} parent=1 // loop_header_branch
      %15 = sbr.rel (%p13) target = $region8
    $region5: #{attention_layer_forward.9} parent=1 // loop_body
      %s17 = ssub.s32 %s12, 1
      %s18 = ssub.s32 %s12, 2
      %s31 = sadd.s32 1, %s22
      %p32 = scmp.ge.s32.totalorder %s31, 4
      %s33 = scalar_select %p32, 0, %s31
      %s34 = sadd.s32 1, %s21
      %s35 = scalar_select %p32, %s34, %s21
      %p36 = scmp.ge.s32.totalorder %s35, 1
      %s37 = scalar_select %p36, 0, %s35
      %s38 = sadd.s32 1, %s20
      %s39 = scalar_select %p36, %s38, %s20
      %p40 = scmp.ge.s32.totalorder %s39, 1
      %s41 = scalar_select %p40, 0, %s39
      %s42 = sadd.s32 1, %s19
      %s43 = scalar_select %p40, %s42, %s19
      %p44 = scmp.ge.s32.totalorder %s43, 2
      %s45 = scalar_select %p44, 0, %s43
      %s46 = ssub.s32 %s19, %s45
      %s47 = ssub.s32 %s22, %s33
      %s48 = sor.u32 %s46, %s47
      %s49 = ssub.s32 %s20, %s41
      %s50 = sor.u32 %s48, %s49
      %p51 = scmp.eq.s32.totalorder %s50, 0
      %s53 = sadd.s32 %s52, 1
      %s54 = scalar_select %p51, %s52, %s53
      %p57 = pneg %p51
      %p58 = scmp.eq.s32.totalorder %s12, 7
      %p59 = por %p57, %p58
      %p60 = scmp.ne.s32.totalorder %s52, %s55
      %p61 = scmp.eq.s32.totalorder %s12, 0
      %p62 = por %p60, %p61
      %p63 = scmp.ne.s32.totalorder %s52, %s55
      %p64 = scmp.eq.s32.totalorder %s17, 7
      %p65 = por %p63, %p64
      %p66 = scmp.ne.s32.totalorder %s55, %s56
      %p67 = scmp.eq.s32.totalorder %s17, 0
      %p68 = por %p66, %p67
      %p69 = scmp.ne.s32.totalorder %s55, %s56
      %p70 = scmp.eq.s32.totalorder %s18, 7
      %p71 = por %p69, %p70
      %p73 = scmp.ne.s32.totalorder %s56, %s72
      %p74 = scmp.eq.s32.totalorder %s18, 0
      %p75 = por %p73, %p74
      %s76 = ssub.s32 %s22, %s33
      %s77 = ssub.s32 %s21, %s37
      %s78 = sor.u32 %s76, %s77
      %p79 = scmp.eq.s32.totalorder %s78, 0
      %s81 = sadd.s32 %s80, 1
      %s82 = scalar_select %p79, %s80, %s81
      %p85 = pneg %p79
      %p86 = scmp.eq.s32.totalorder %s12, 7
      %p87 = por %p85, %p86
      %p88 = scmp.ne.s32.totalorder %s80, %s83
      %p89 = scmp.eq.s32.totalorder %s12, 0
      %p90 = por %p88, %p89
      %p91 = scmp.ne.s32.totalorder %s80, %s83
      %p92 = scmp.eq.s32.totalorder %s17, 7
      %p93 = por %p91, %p92
      %p94 = scmp.ne.s32.totalorder %s83, %s84
      %p95 = scmp.eq.s32.totalorder %s17, 0
      %p96 = por %p94, %p95
      %p97 = scmp.ne.s32.totalorder %s83, %s84
      %p98 = scmp.eq.s32.totalorder %s18, 7
      %p99 = por %p97, %p98
      %p101 = scmp.ne.s32.totalorder %s84, %s100
      %p102 = scmp.eq.s32.totalorder %s18, 0
      %p103 = por %p101, %p102
      %s104 = ssub.s32 %s21, %s37
      %p105 = scmp.eq.s32.totalorder %s104, 0
      %s107 = sadd.s32 %s106, 1
      %s108 = scalar_select %p105, %s106, %s107
      %p111 = pneg %p105
      %p112 = scmp.eq.s32.totalorder %s12, 7
      %p113 = por %p111, %p112
      %p114 = scmp.ne.s32.totalorder %s106, %s109
      %p115 = scmp.eq.s32.totalorder %s12, 0
      %p116 = por %p114, %p115
      %p117 = scmp.ne.s32.totalorder %s106, %s109
      %p118 = scmp.eq.s32.totalorder %s17, 7
      %p119 = por %p117, %p118
      %p120 = scmp.ne.s32.totalorder %s109, %s110
      %p121 = scmp.eq.s32.totalorder %s17, 0
      %p122 = por %p120, %p121
      %p123 = scmp.ne.s32.totalorder %s109, %s110
      %p124 = scmp.eq.s32.totalorder %s18, 7
      %p125 = por %p123, %p124
      %p127 = scmp.ne.s32.totalorder %s110, %s126
      %p128 = scmp.eq.s32.totalorder %s18, 0
      %p129 = por %p127, %p128
      %s130 = ssub.s32 %s19, %s45
      %s131 = ssub.s32 %s20, %s41
      %s132 = sor.u32 %s130, %s131
      %s133 = ssub.s32 %s21, %s37
      %s134 = sor.u32 %s132, %s133
      %p135 = scmp.eq.s32.totalorder %s134, 0
      %s137 = sadd.s32 %s136, 1
      %s138 = scalar_select %p135, %s136, %s137
      %p141 = pneg %p135
      %p142 = scmp.eq.s32.totalorder %s12, 7
      %p143 = por %p141, %p142
      %p144 = scmp.ne.s32.totalorder %s136, %s139
      %p145 = scmp.eq.s32.totalorder %s12, 0
      %p146 = por %p144, %p145
      %p147 = scmp.ne.s32.totalorder %s136, %s139
      %p148 = scmp.eq.s32.totalorder %s17, 7
      %p149 = por %p147, %p148
      %p150 = scmp.ne.s32.totalorder %s139, %s140
      %p151 = scmp.eq.s32.totalorder %s17, 0
      %p152 = por %p150, %p151
      %p153 = scmp.ne.s32.totalorder %s139, %s140
      %p154 = scmp.eq.s32.totalorder %s18, 7
      %p155 = por %p153, %p154
      %p157 = scmp.ne.s32.totalorder %s140, %s156
      %p158 = scmp.eq.s32.totalorder %s18, 0
      %p159 = por %p157, %p158
      %p160 = scmp.le.s32.totalorder 1, %s12
      %p161 = scmp.lt.s32.totalorder %s12, 9
      %p162 = pnand %p160, %p161
      %p163 = pneg %p162
      // Predicated region
      $region9: #{attention_layer_forward.9} parent=5 // pred_check
        _
      $region10: #{attention_layer_forward.9} parent=5 // pred_check_branch
        %165 = sbr.rel (%p162) target = $region12
      $region11: #{attention_layer_forward.9} parent=5 // pred_region
        %s166 = ssub.s32 %s12, 1
        // Predicated region
        $region13: #{attention_layer_forward.9} parent=11 // pred_check
          %p167 = pneg %p122
        $region14: #{attention_layer_forward.9} parent=11 // pred_check_branch
          %169 = sbr.rel (%p167) target = $region16
        $region15: #{attention_layer_forward.9} parent=11 // pred_region
          %p170 = scmp.lt.s32.totalorder %s25, 0
          %s171 = scalar_select %p170, %s25, 0
          %s172 = scalar_lea.vmem %s2, %s171
        $region16: #{attention_layer_forward.9} parent=11 // pred_fallthru
          _
      $region12: #{attention_layer_forward.9} parent=5 // pred_fallthru
        _
      %p173 = scmp.lt.s32.totalorder %s12, 8
      // Predicated region
      $region17: #{attention_layer_forward.9} parent=5 // pred_check
        %p174 = pneg %p173
      $region18: #{attention_layer_forward.9} parent=5 // pred_check_branch
        %176 = sbr.rel (%p174) target = $region20
      $region19: #{attention_layer_forward.9} parent=5 // pred_region
        // Predicated region
        $region21: #{attention_layer_forward.9} parent=19 // pred_check
          %p177 = pneg %p62
        $region22: #{attention_layer_forward.9} parent=19 // pred_check_branch
          %179 = sbr.rel (%p177) target = $region24
        $region23: #{attention_layer_forward.9} parent=19 // pred_region
          %p180 = scmp.lt.s32.totalorder %s19, 1
          %s181 = scalar_select %p180, %s19, 1
          %p182 = scmp.lt.s32.totalorder %s22, 3
          %s183 = scalar_select %p182, %s22, 3
          %p184 = scmp.lt.s32.totalorder %s20, 0
          %s185 = scalar_select %p184, %s20, 0
          %s186 = sadd.s32 %s185, %s183
          %s187 = smul.addr %s181, 4
          %s188 = sadd.s32 %s186, %s187
          %s189 = smul.addr %s188, 8
          %s190 = scalar_lea.vmem %s0, %s189
        $region24: #{attention_layer_forward.9} parent=19 // pred_fallthru
          _
        // Predicated region
        $region25: #{attention_layer_forward.9} parent=19 // pred_check
          %p191 = pneg %p90
        $region26: #{attention_layer_forward.9} parent=19 // pred_check_branch
          %193 = sbr.rel (%p191) target = $region28
        $region27: #{attention_layer_forward.9} parent=19 // pred_region
          %p194 = scmp.lt.s32.totalorder %s22, 3
          %s195 = scalar_select %p194, %s22, 3
          %p196 = scmp.lt.s32.totalorder %s21, 0
          %s197 = scalar_select %p196, %s21, 0
          %s198 = sadd.s32 %s197, %s195
          %s199 = smul.addr %s198, 8
          %s200 = scalar_lea.vmem %s1, %s199
        $region28: #{attention_layer_forward.9} parent=19 // pred_fallthru
          _
      $region20: #{attention_layer_forward.9} parent=5 // pred_fallthru
        _
      %p201 = scmp.le.s32.totalorder 1, %s12
      %p202 = scmp.lt.s32.totalorder %s12, 9
      %p203 = pnand %p201, %p202
      %p204 = pneg %p203
      // Predicated region
      $region29: #{attention_layer_forward.9} parent=5 // pred_check
        _
      $region30: #{attention_layer_forward.9} parent=5 // pred_check_branch
        %206 = sbr.rel (%p203) target = $region32
      $region31: #{attention_layer_forward.9} parent=5 // pred_region
        %s207 = ssub.s32 %s12, 1
        %p208 = scmp.lt.s32.totalorder %s23, 1
        %s209 = scalar_select %p208, %s23, 1
        %p210 = scmp.lt.s32.totalorder %s26, 3
        %s211 = scalar_select %p210, %s26, 3
        %p212 = scmp.lt.s32.totalorder %s24, 0
        %s213 = scalar_select %p212, %s24, 0
        %s214 = sadd.s32 %s213, %s211
        %s215 = smul.addr %s209, 4
        %s216 = sadd.s32 %s214, %s215
        %s217 = smul.addr %s216, 8
        %s218 = scalar_lea.vmem %s0, %s217
        %p219 = pneg %p68
        %p220 = pneg %p65
        %p221 = scmp.lt.s32.totalorder %s26, 3
        %s222 = scalar_select %p221, %s26, 3
        %p223 = scmp.lt.s32.totalorder %s25, 0
        %s224 = scalar_select %p223, %s25, 0
        %s225 = sadd.s32 %s224, %s222
        %s226 = smul.addr %s225, 8
        %s227 = scalar_lea.vmem %s1, %s226
        %p228 = pneg %p96
        %p229 = pneg %p93
        %p230 = scmp.lt.s32.totalorder %s25, 0
        %s231 = scalar_select %p230, %s25, 0
        %s232 = scalar_lea.vmem %s2, %s231
        %p233 = pneg %p122
        %p234 = pneg %p119
        %p235 = pneg %p152
        %p236 = pneg %p149
        %s237 = sand.u32 %s139, 1
        %s238 = scalar_lea.sflag [#allocation4], %s237
        %s239 = sand.u32 %s139, 1
        %s240 = smul.addr %s239, 8
        %s241 = scalar_lea.vmem [#allocation3], %s240
        %p242 = scmp.lt.s32.totalorder %s23, 1
        %s243 = scalar_select %p242, %s23, 1
        %p244 = scmp.lt.s32.totalorder %s26, 3
        %s245 = scalar_select %p244, %s26, 3
        %p246 = scmp.lt.s32.totalorder %s24, 0
        %s247 = scalar_select %p246, %s24, 0
        %s248 = sadd.s32 %s247, %s245
        %s249 = smul.addr %s243, 4
        %s250 = sadd.s32 %s248, %s249
        %s251 = smul.addr %s250, 8
        %s252 = scalar_lea.vmem %s0, %s251
        %p253 = scmp.lt.s32.totalorder %s26, 3
        %s254 = scalar_select %p253, %s26, 3
        %p255 = scmp.lt.s32.totalorder %s25, 0
        %s256 = scalar_select %p255, %s25, 0
        %s257 = sadd.s32 %s256, %s254
        %s258 = smul.addr %s257, 8
        %s259 = scalar_lea.vmem %s1, %s258
        %p260 = scmp.lt.s32.totalorder %s25, 0
        %s261 = scalar_select %p260, %s25, 0
        %s262 = scalar_lea.vmem %s2, %s261
        %p263 = scmp.eq.s32.totalorder %s26, 0
        // Predicated region
        $region33: #{attention_layer_forward.9} parent=31 // pred_check
          %p264 = pneg %p263
        $region34: #{attention_layer_forward.9} parent=31 // pred_check_branch
          %266 = sbr.rel (%p264) target = $region36
        $region35: #{attention_layer_forward.9} parent=31 // pred_region
          %vm267 = vcmask 261120
          %268 = vst.msk [vmem:[#allocation2] sm:$0xff] %vm267, 0.0
        $region36: #{attention_layer_forward.9} parent=31 // pred_fallthru
          _
        %v269 = vld [vmem:[#allocation2] sm:$0xff]
        %v270 = vld [vmem:[%s252] sm:$0xff]
        %v271 = vld [vmem:[%s259] sm:$0xff]
        %vm272 = vcmask 64512
        %v274 = vsel %vm272, %v270, 0
        %276 = vmatprep.subr.mxu0 0.0
        %277 = vmatpush1.msra.mxu0 0.0
        %278 = vmatprep.subr.mxu0 0.0
        %279 = vmatpush1.msra.mxu0 0.0
        %280 = vmatprep.subr.mxu0 0.0
        %281 = vmatpush1.msra.mxu0 0.0
        %282 = vmatprep.subr.mxu0 0.0
        %283 = vmatpush1.msra.mxu0 0.0
        %284 = vmatprep.subr.mxu0 0.0
        %285 = vmatpush1.msra.mxu0 0.0
        %286 = vmatprep.subr.mxu0 0.0
        %287 = vmatpush1.msra.mxu0 0.0
        %288 = vmatprep.subr.mxu0 0.0
        %289 = vmatpush1.msra.mxu0 0.0
        %290 = vmatprep.subr.mxu0 0.0
        %291 = vmatpush1.msra.mxu0 0.0
        %292 = vmatprep.subr.mxu0 0.0
        %293 = vmatpush1.msra.mxu0 0.0
        %294 = vmatprep.subr.mxu0 0.0
        %295 = vmatpush1.msra.mxu0 0.0
        %296 = vmatprep.subr.mxu0 0.0
        %297 = vmatpush1.msra.mxu0 0.0
        %298 = vmatprep.subr.mxu0 0.0
        %299 = vmatpush1.msra.mxu0 0.0
        %300 = vmatprep.subr.mxu0 0.0
        %301 = vmatpush1.msra.mxu0 0.0
        %302 = vmatprep.subr.mxu0 0.0
        %303 = vmatpush1.msra.mxu0 0.0
        %304 = vmatprep.subr.mxu0 0.0
        %305 = vmatpush1.msra.mxu0 0.0
        %306 = vmatprep.subr.mxu0 0.0
        %307 = vmatpush1.msra.mxu0 %v271
        %308 = vmatprep.subr.mxu0 0.0
        %309 = vmatpush2.msra.mxu0 0.0
        %310 = vmatprep.subr.mxu0 0.0
        %311 = vmatpush2.msra.mxu0 0.0
        %312 = vmatprep.subr.mxu0 0.0
        %313 = vmatpush2.msra.mxu0 0.0
        %314 = vmatprep.subr.mxu0 0.0
        %315 = vmatpush2.msra.mxu0 0.0
        %316 = vmatprep.subr.mxu0 0.0
        %317 = vmatpush2.msra.mxu0 0.0
        %318 = vmatprep.subr.mxu0 0.0
        %319 = vmatpush2.msra.mxu0 0.0
        %320 = vmatprep.subr.mxu0 0.0
        %321 = vmatpush2.msra.mxu0 0.0
        %322 = vmatprep.subr.mxu0 0.0
        %323 = vmatpush2.msra.mxu0 0.0
        %324 = vmatprep.subr.mxu0 0.0
        %325 = vmatpush2.msra.mxu0 0.0
        %326 = vmatprep.subr.mxu0 0.0
        %327 = vmatpush2.msra.mxu0 0.0
        %328 = vmatprep.subr.mxu0 0.0
        %329 = vmatpush2.msra.mxu0 0.0
        %330 = vmatprep.subr.mxu0 0.0
        %331 = vmatpush2.msra.mxu0 0.0
        %332 = vmatprep.subr.mxu0 0.0
        %333 = vmatpush2.msra.mxu0 0.0
        %334 = vmatprep.subr.mxu0 0.0
        %335 = vmatpush2.msra.mxu0 0.0
        %336 = vmatprep.subr.mxu0 0.0
        %337 = vmatpush2.msra.mxu0 0.0
        %338 = vmatprep.subr.mxu0 0.0
        %339 = vmatpush2.msra.mxu0 0.0
        %340 = vmatprep.mubr.f32.mxu0 0.0
        %341 = vmatmul.mubr.f32.gmra.mxu0 %v274
        %v342 = vpop.f32.mrf.mxu0
        %v343 = vadd.f32 0.0, %v342
        %v344 = vpop.f32.mrf.mxu0
        %345 = vdwg.mxu0
        %v346 = vadd.f32 %v269, %v343
        %vm347 = vcmask 261120
        %348 = vst.msk [vmem:[#allocation2] sm:$0xff] %vm347, %v346
        %p349 = scmp.eq.s32.totalorder %s26, 3
        // Predicated region
        $region37: #{attention_layer_forward.9} parent=31 // pred_check
          %p350 = pneg %p349
        $region38: #{attention_layer_forward.9} parent=31 // pred_check_branch
          %352 = sbr.rel (%p350) target = $region40
        $region39: #{attention_layer_forward.9} parent=31 // pred_region
          %v353 = vld [vmem:[#allocation2] sm:$0xff]
          %v354 = vld [vmem:[%s262] sm:$0x1]
          %v356 = vlaneseq
          %v357 = vshrl.u32 %v356, 7
          %v358 = vsub.s32 0, %v357
          %v359 = vrot.slane %v354, %v358
          %v361 = vadd.f32 %v353, %v359
          %362 = vst.msk [vmem:[%s241] sm:$0xff] %vm347, %v361
        $region40: #{attention_layer_forward.9} parent=31 // pred_fallthru
          _
        %s363 = sand.u32 %s139, 1
        %s364 = scalar_lea.sflag [#allocation4], %s363
        %s365 = sand.u32 %s139, 1
        %s366 = smul.addr %s365, 8
        %s367 = scalar_lea.vmem [#allocation3], %s366
        // Predicated region
        $region41: #{attention_layer_forward.9} parent=31 // pred_check
          %p368 = pneg %p149
        $region42: #{attention_layer_forward.9} parent=31 // pred_check_branch
          %370 = sbr.rel (%p368) target = $region44
        $region43: #{attention_layer_forward.9} parent=31 // pred_region
          %s372 = ssub.s32 128, 128
          %373 = vsyncadd %s364, %s372
          %s374 = sadd.s32 %s25, %s24
          %s375 = sadd.s32 %s374, %s23
          %s376 = smul.addr %s375, 128
          %s377 = scalar_lea.hbm %s3, %s376
          %s379 = sshll.u32 %s367, 4
          %s380 = int_to_ptr.vmem [resolvable:$true] %s379
          %382 = dma.vmem_to_hbm [thread:$0]  %s380, 128, %s377, %s364
        $region44: #{attention_layer_forward.9} parent=31 // pred_fallthru
          _
      $region32: #{attention_layer_forward.9} parent=5 // pred_fallthru
        _
      %p383 = scmp.le.s32.totalorder 2, %s12
      // Predicated region
      $region45: #{attention_layer_forward.9} parent=5 // pred_check
        %p384 = pneg %p383
      $region46: #{attention_layer_forward.9} parent=5 // pred_check_branch
        %386 = sbr.rel (%p384) target = $region48
      $region47: #{attention_layer_forward.9} parent=5 // pred_region
        %s387 = ssub.s32 %s12, 2
        // Predicated region
        $region49: #{attention_layer_forward.9} parent=47 // pred_check
          %p388 = pneg %p155
        $region50: #{attention_layer_forward.9} parent=47 // pred_check_branch
          %390 = sbr.rel (%p388) target = $region52
        $region51: #{attention_layer_forward.9} parent=47 // pred_region
          %s391 = sand.u32 %s140, 1
          %s392 = scalar_lea.sflag [#allocation4], %s391
          %s393 = sand.u32 %s140, 1
          %s394 = smul.addr %s393, 8
          %s395 = scalar_lea.vmem [#allocation3], %s394
          %396 = dma.done %s392, 128
        $region52: #{attention_layer_forward.9} parent=47 // pred_fallthru
          _
      $region48: #{attention_layer_forward.9} parent=5 // pred_fallthru
        _
    $region6: #{attention_layer_forward.9} parent=1 // loop_footer
      %s16 = sadd.s32 1, %s12
    $region7: #{attention_layer_forward.9} parent=1 // loop_footer_branch
      %11 = sbr.rel target = $region3
    $region8: #{attention_layer_forward.9} parent=1 // loop_exit
      _
    %397 = vsyncpa [#allocation4], 1
    %s398 = scalar_lea.sflag [#allocation4], 1
    %399 = vsyncpa %s398, 1

// kernel: attention_layer_forward.6
$region0: #{attention_layer_forward.6}
  #allocation0 [shape = 'u32[]', space=smem, size = 0x4, offset = 0x4, fixed_abs, tag = 'smem constant byte address 0x4 - core index']
  #allocation1 [shape = 'u32[144,128]{1,0:T(1,128)}', space=vmem, size = 0x12000, scoped, tag = 'internal scratch']
  #allocation2 [shape = 'f32[8,32]{1,0:T(8,128)}', space=vmem, size = 0x1000, scoped, tag = 'scratch operand']
  %s0 = inlined_call_operand.vmem [shape: f32[2,8,32], index: 0, kind: input, shape index: {}]
  %s1 = inlined_call_operand.hbm [shape: f32[32,32], index: 1, kind: input, shape index: {}]
  %s2 = inlined_call_operand.hbm [shape: f32[1,32], index: 2, kind: input, shape index: {}]
  %s3 = inlined_call_operand.vmem [shape: f32[2,4,8,8], index: 3, kind: output, shape index: {}]
  %s4 = sld [smem:[#allocation0]]
  $region61: #{attention_layer_forward.6} parent=0
    _
  %s6 = ssub.s32 1, %s4
  %s7 = scalar_select 0, %s6, %s4
  $region1: #{attention_layer_forward.6} parent=0
    #allocation3 [shape = 'u8[16384]{0}', space=vmem, size = 0x4000, scoped, tag = 'input window, operand 1, single buffered']
    #allocation4 [shape = 's32[2]{0}', space=sflag, size = 0x8, scoped, tag = 'scoped memory for attention_layer_forward.6']
    #allocation5 [shape = 'u8[512]{0}', space=vmem, size = 0x400, scoped, tag = 'input window, operand 2, single buffered']
    #allocation6 [shape = 's32[1]{0}', space=sflag, size = 0x4, scoped, tag = 'scoped memory for attention_layer_forward.6']
    %8 = vsyncpa [#allocation4], 0
    %9 = vsyncpa [#allocation6], 0
    loop: start=0, step=1, limit=4
    $region2: #{attention_layer_forward.6} parent=1 // loop_pre_header
      _
    $region3: #{attention_layer_forward.6} parent=1 // loop_header
      %s11 = sphi 0, %s15
      %p12 = scmp.ge.s32.totalorder %s11, 4
      %s18 = sphi 0, %s44
      %s19 = sphi 0, %s40
      %s20 = sphi 0, %s36
      %s21 = sphi 0, %s32
      %s22 = sphi 0, %s18
      %s23 = sphi 0, %s19
      %s24 = sphi 0, %s20
      %s25 = sphi 0, %s21
      %s26 = sphi 0, %s22
      %s27 = sphi 0, %s23
      %s28 = sphi 0, %s24
      %s29 = sphi 0, %s25
      %s51 = sphi 0, %s53
      %s54 = sphi 0, %s51
      %s55 = sphi 0, %s54
      %s71 = sphi 0, %s55
      %s79 = sphi 0, %s81
      %s82 = sphi 0, %s79
      %s83 = sphi 0, %s82
      %s99 = sphi 0, %s83
      %s105 = sphi 0, %s107
      %s108 = sphi 0, %s105
      %s109 = sphi 0, %s108
      %s125 = sphi 0, %s109
      %s135 = sphi 0, %s137
      %s138 = sphi 0, %s135
      %s139 = sphi 0, %s138
      %s155 = sphi 0, %s139
    $region4: #{attention_layer_forward.6} parent=1 // loop_header_branch
      %14 = sbr.rel (%p12) target = $region8
    $region5: #{attention_layer_forward.6} parent=1 // loop_body
      %s16 = ssub.s32 %s11, 1
      %s17 = ssub.s32 %s11, 2
      %s30 = sadd.s32 1, %s21
      %p31 = scmp.ge.s32.totalorder %s30, 1
      %s32 = scalar_select %p31, 0, %s30
      %s33 = sadd.s32 1, %s20
      %s34 = scalar_select %p31, %s33, %s20
      %p35 = scmp.ge.s32.totalorder %s34, 1
      %s36 = scalar_select %p35, 0, %s34
      %s37 = sadd.s32 1, %s19
      %s38 = scalar_select %p35, %s37, %s19
      %p39 = scmp.ge.s32.totalorder %s38, 1
      %s40 = scalar_select %p39, 0, %s38
      %s41 = sadd.s32 1, %s18
      %s42 = scalar_select %p39, %s41, %s18
      %p43 = scmp.ge.s32.totalorder %s42, 2
      %s44 = scalar_select %p43, 0, %s42
      %s45 = ssub.s32 %s18, %s44
      %s46 = ssub.s32 %s19, %s40
      %s47 = sor.u32 %s45, %s46
      %s48 = ssub.s32 %s21, %s32
      %s49 = sor.u32 %s47, %s48
      %p50 = scmp.eq.s32.totalorder %s49, 0
      %s52 = sadd.s32 %s51, 1
      %s53 = scalar_select %p50, %s51, %s52
      %p56 = pneg %p50
      %p57 = scmp.eq.s32.totalorder %s11, 1
      %p58 = por %p56, %p57
      %p59 = scmp.ne.s32.totalorder %s51, %s54
      %p60 = scmp.eq.s32.totalorder %s11, 0
      %p61 = por %p59, %p60
      %p62 = scmp.ne.s32.totalorder %s51, %s54
      %p63 = scmp.eq.s32.totalorder %s16, 1
      %p64 = por %p62, %p63
      %p65 = scmp.ne.s32.totalorder %s54, %s55
      %p66 = scmp.eq.s32.totalorder %s16, 0
      %p67 = por %p65, %p66
      %p68 = scmp.ne.s32.totalorder %s54, %s55
      %p69 = scmp.eq.s32.totalorder %s17, 1
      %p70 = por %p68, %p69
      %p72 = scmp.ne.s32.totalorder %s55, %s71
      %p73 = scmp.eq.s32.totalorder %s17, 0
      %p74 = por %p72, %p73
      %s75 = ssub.s32 %s21, %s32
      %s76 = ssub.s32 %s20, %s36
      %s77 = sor.u32 %s75, %s76
      %p78 = scmp.eq.s32.totalorder %s77, 0
      %s80 = sadd.s32 %s79, 1
      %s81 = scalar_select %p78, %s79, %s80
      %p84 = pneg %p78
      %p85 = scmp.eq.s32.totalorder %s11, 1
      %p86 = por %p84, %p85
      %p87 = scmp.ne.s32.totalorder %s79, %s82
      %p88 = scmp.eq.s32.totalorder %s11, 0
      %p89 = por %p87, %p88
      %p90 = scmp.ne.s32.totalorder %s79, %s82
      %p91 = scmp.eq.s32.totalorder %s16, 1
      %p92 = por %p90, %p91
      %p93 = scmp.ne.s32.totalorder %s82, %s83
      %p94 = scmp.eq.s32.totalorder %s16, 0
      %p95 = por %p93, %p94
      %p96 = scmp.ne.s32.totalorder %s82, %s83
      %p97 = scmp.eq.s32.totalorder %s17, 1
      %p98 = por %p96, %p97
      %p100 = scmp.ne.s32.totalorder %s83, %s99
      %p101 = scmp.eq.s32.totalorder %s17, 0
      %p102 = por %p100, %p101
      %s103 = ssub.s32 %s20, %s36
      %p104 = scmp.eq.s32.totalorder %s103, 0
      %s106 = sadd.s32 %s105, 1
      %s107 = scalar_select %p104, %s105, %s106
      %p110 = pneg %p104
      %p111 = scmp.eq.s32.totalorder %s11, 1
      %p112 = por %p110, %p111
      %p113 = scmp.ne.s32.totalorder %s105, %s108
      %p114 = scmp.eq.s32.totalorder %s11, 0
      %p115 = por %p113, %p114
      %p116 = scmp.ne.s32.totalorder %s105, %s108
      %p117 = scmp.eq.s32.totalorder %s16, 1
      %p118 = por %p116, %p117
      %p119 = scmp.ne.s32.totalorder %s108, %s109
      %p120 = scmp.eq.s32.totalorder %s16, 0
      %p121 = por %p119, %p120
      %p122 = scmp.ne.s32.totalorder %s108, %s109
      %p123 = scmp.eq.s32.totalorder %s17, 1
      %p124 = por %p122, %p123
      %p126 = scmp.ne.s32.totalorder %s109, %s125
      %p127 = scmp.eq.s32.totalorder %s17, 0
      %p128 = por %p126, %p127
      %s129 = ssub.s32 %s18, %s44
      %s130 = ssub.s32 %s20, %s36
      %s131 = sor.u32 %s129, %s130
      %s132 = ssub.s32 %s19, %s40
      %s133 = sor.u32 %s131, %s132
      %p134 = scmp.eq.s32.totalorder %s133, 0
      %s136 = sadd.s32 %s135, 1
      %s137 = scalar_select %p134, %s135, %s136
      %p140 = pneg %p134
      %p141 = scmp.eq.s32.totalorder %s11, 1
      %p142 = por %p140, %p141
      %p143 = scmp.ne.s32.totalorder %s135, %s138
      %p144 = scmp.eq.s32.totalorder %s11, 0
      %p145 = por %p143, %p144
      %p146 = scmp.ne.s32.totalorder %s135, %s138
      %p147 = scmp.eq.s32.totalorder %s16, 1
      %p148 = por %p146, %p147
      %p149 = scmp.ne.s32.totalorder %s138, %s139
      %p150 = scmp.eq.s32.totalorder %s16, 0
      %p151 = por %p149, %p150
      %p152 = scmp.ne.s32.totalorder %s138, %s139
      %p153 = scmp.eq.s32.totalorder %s17, 1
      %p154 = por %p152, %p153
      %p156 = scmp.ne.s32.totalorder %s139, %s155
      %p157 = scmp.eq.s32.totalorder %s17, 0
      %p158 = por %p156, %p157
      %p159 = scmp.le.s32.totalorder 1, %s11
      %p160 = scmp.lt.s32.totalorder %s11, 3
      %p161 = pnand %p159, %p160
      %p162 = pneg %p161
      // Predicated region
      $region9: #{attention_layer_forward.6} parent=5 // pred_check
        _
      $region10: #{attention_layer_forward.6} parent=5 // pred_check_branch
        %164 = sbr.rel (%p161) target = $region12
      $region11: #{attention_layer_forward.6} parent=5 // pred_region
        %s165 = ssub.s32 %s11, 1
        // Predicated region
        $region13: #{attention_layer_forward.6} parent=11 // pred_check
          %p166 = pneg %p95
        $region14: #{attention_layer_forward.6} parent=11 // pred_check_branch
          %168 = sbr.rel (%p166) target = $region16
        $region15: #{attention_layer_forward.6} parent=11 // pred_region
          %s169 = smul.u32 4, %s25
          %s171 = ssub.s32 512, 512
          %172 = vsyncadd [#allocation4], %s171
          %s173 = sadd.s32 %s24, %s169
          %s174 = smul.addr %s173, 128
          %s175 = scalar_lea.hbm %s1, %s174
          %s176 = sshll.u32 [#allocation3], 4
          %s177 = int_to_ptr.vmem [resolvable:$true] %s176
          %182 = dma.hbm_to_vmem [thread:$0]  %s175, 512, %s177, [#allocation4], 128, 128, 8
        $region16: #{attention_layer_forward.6} parent=11 // pred_fallthru
          _
        // Predicated region
        $region17: #{attention_layer_forward.6} parent=11 // pred_check
          %p183 = pneg %p121
        $region18: #{attention_layer_forward.6} parent=11 // pred_check_branch
          %185 = sbr.rel (%p183) target = $region20
        $region19: #{attention_layer_forward.6} parent=11 // pred_region
          %s187 = ssub.s32 16, 16
          %188 = vsyncadd [#allocation6], %s187
          %s189 = smul.addr %s24, 16
          %s190 = scalar_lea.hbm %s2, %s189
          %s192 = sshll.u32 [#allocation5], 4
          %s193 = int_to_ptr.vmem [resolvable:$true] %s192
          %195 = dma.hbm_to_vmem [thread:$0]  %s190, 16, %s193, [#allocation6]
        $region20: #{attention_layer_forward.6} parent=11 // pred_fallthru
          _
      $region12: #{attention_layer_forward.6} parent=5 // pred_fallthru
        _
      %p196 = scmp.lt.s32.totalorder %s11, 2
      // Predicated region
      $region21: #{attention_layer_forward.6} parent=5 // pred_check
        %p197 = pneg %p196
      $region22: #{attention_layer_forward.6} parent=5 // pred_check_branch
        %199 = sbr.rel (%p197) target = $region24
      $region23: #{attention_layer_forward.6} parent=5 // pred_region
        // Predicated region
        $region25: #{attention_layer_forward.6} parent=23 // pred_check
          %p200 = pneg %p61
        $region26: #{attention_layer_forward.6} parent=23 // pred_check_branch
          %202 = sbr.rel (%p200) target = $region28
        $region27: #{attention_layer_forward.6} parent=23 // pred_region
          %p203 = scmp.lt.s32.totalorder %s18, 1
          %s204 = scalar_select %p203, %s18, 1
          %p205 = scmp.lt.s32.totalorder %s19, 0
          %s206 = scalar_select %p205, %s19, 0
          %p207 = scmp.lt.s32.totalorder %s21, 0
          %s208 = scalar_select %p207, %s21, 0
          %s209 = sadd.s32 %s208, %s206
          %s210 = sadd.s32 %s209, %s204
          %s211 = smul.addr %s210, 8
          %s212 = scalar_lea.vmem %s0, %s211
        $region28: #{attention_layer_forward.6} parent=23 // pred_fallthru
          _
      $region24: #{attention_layer_forward.6} parent=5 // pred_fallthru
        _
      %p213 = scmp.le.s32.totalorder 1, %s11
      %p214 = scmp.lt.s32.totalorder %s11, 3
      %p215 = pnand %p213, %p214
      %p216 = pneg %p215
      // Predicated region
      $region29: #{attention_layer_forward.6} parent=5 // pred_check
        _
      $region30: #{attention_layer_forward.6} parent=5 // pred_check_branch
        %218 = sbr.rel (%p215) target = $region32
      $region31: #{attention_layer_forward.6} parent=5 // pred_region
        %s219 = ssub.s32 %s11, 1
        // Predicated region
        $region33: #{attention_layer_forward.6} parent=31 // pred_check
          %p220 = pneg %p95
        $region34: #{attention_layer_forward.6} parent=31 // pred_check_branch
          %222 = sbr.rel (%p220) target = $region36
        $region35: #{attention_layer_forward.6} parent=31 // pred_region
          %223 = dma.done [#allocation4], 512
        $region36: #{attention_layer_forward.6} parent=31 // pred_fallthru
          _
        // Predicated region
        $region37: #{attention_layer_forward.6} parent=31 // pred_check
          %p224 = pneg %p121
        $region38: #{attention_layer_forward.6} parent=31 // pred_check_branch
          %226 = sbr.rel (%p224) target = $region40
        $region39: #{attention_layer_forward.6} parent=31 // pred_region
          %227 = dma.done [#allocation6], 16
        $region40: #{attention_layer_forward.6} parent=31 // pred_fallthru
          _
        %p228 = scmp.lt.s32.totalorder %s22, 1
        %s229 = scalar_select %p228, %s22, 1
        %p230 = scmp.lt.s32.totalorder %s23, 0
        %s231 = scalar_select %p230, %s23, 0
        %p232 = scmp.lt.s32.totalorder %s25, 0
        %s233 = scalar_select %p232, %s25, 0
        %s234 = sadd.s32 %s233, %s231
        %s235 = sadd.s32 %s234, %s229
        %s236 = smul.addr %s235, 8
        %s237 = scalar_lea.vmem %s0, %s236
        %p238 = pneg %p67
        %p239 = pneg %p64
        %p240 = pneg %p95
        %p241 = pneg %p92
        %p242 = pneg %p121
        %p243 = pneg %p118
        %p244 = pneg %p151
        %p245 = pneg %p148
        %s246 = smul.u32 4, %s24
        %p247 = scmp.lt.s32.totalorder %s22, 1
        %s248 = scalar_select %p247, %s22, 1
        %p249 = scmp.lt.s32.totalorder %s246, 3
        %s250 = scalar_select %p249, %s246, 3
        %p251 = scmp.lt.s32.totalorder %s23, 0
        %s252 = scalar_select %p251, %s23, 0
        %s253 = sadd.s32 %s252, %s250
        %s254 = smul.addr %s248, 4
        %s255 = sadd.s32 %s253, %s254
        %s256 = smul.addr %s255, 8
        %s257 = scalar_lea.vmem %s3, %s256
        %p258 = scmp.lt.s32.totalorder %s22, 1
        %s259 = scalar_select %p258, %s22, 1
        %p260 = scmp.lt.s32.totalorder %s23, 0
        %s261 = scalar_select %p260, %s23, 0
        %p262 = scmp.lt.s32.totalorder %s25, 0
        %s263 = scalar_select %p262, %s25, 0
        %s264 = sadd.s32 %s263, %s261
        %s265 = sadd.s32 %s264, %s259
        %s266 = smul.addr %s265, 8
        %s267 = scalar_lea.vmem %s0, %s266
        %s268 = smul.u32 4, %s25
        %s269 = smul.u32 4, %s24
        %p270 = scmp.lt.s32.totalorder %s22, 1
        %s271 = scalar_select %p270, %s22, 1
        %p272 = scmp.lt.s32.totalorder %s269, 3
        %s273 = scalar_select %p272, %s269, 3
        %p274 = scmp.lt.s32.totalorder %s23, 0
        %s275 = scalar_select %p274, %s23, 0
        %s276 = sadd.s32 %s275, %s273
        %s277 = smul.addr %s271, 4
        %s278 = sadd.s32 %s276, %s277
        %s279 = smul.addr %s278, 8
        %s280 = scalar_lea.vmem %s3, %s279
        %s281 = smul.u32 4, %s24
        %p282 = scmp.eq.s32.totalorder %s25, 0
        // Predicated region
        $region41: #{attention_layer_forward.6} parent=31 // pred_check
          %p283 = pneg %p282
        $region42: #{attention_layer_forward.6} parent=31 // pred_check_branch
          %285 = sbr.rel (%p283) target = $region44
        $region43: #{attention_layer_forward.6} parent=31 // pred_region
          %vm286 = vcmask 261120
          %287 = vst.msk [vmem:[#allocation2] sm:$0xff] %vm286, 0.0
        $region44: #{attention_layer_forward.6} parent=31 // pred_fallthru
          _
        %v288 = vld [vmem:[#allocation2] sm:$0xff]
        %v289 = vld [vmem:[%s267] sm:$0xff]
        %v290 = vld [vmem:[#allocation3] sm:$0xff]
        %v291 = vld [vmem:[#allocation3 + $0x8] sm:$0xff]
        %v292 = vld [vmem:[#allocation3 + $0x10] sm:$0xff]
        %v293 = vld [vmem:[#allocation3 + $0x18] sm:$0xff]
        %vm294 = vcmask 261120
        %v296 = vsel %vm294, %v289, 0
        %298 = vmatprep.subr.mxu0 0.0
        %299 = vmatpush1.msra.mxu0 0.0
        %300 = vmatprep.subr.mxu0 0.0
        %301 = vmatpush1.msra.mxu0 0.0
        %302 = vmatprep.subr.mxu0 0.0
        %303 = vmatpush1.msra.mxu0 0.0
        %304 = vmatprep.subr.mxu0 0.0
        %305 = vmatpush1.msra.mxu0 0.0
        %306 = vmatprep.subr.mxu0 0.0
        %307 = vmatpush1.msra.mxu0 0.0
        %308 = vmatprep.subr.mxu0 0.0
        %309 = vmatpush1.msra.mxu0 0.0
        %310 = vmatprep.subr.mxu0 0.0
        %311 = vmatpush1.msra.mxu0 0.0
        %312 = vmatprep.subr.mxu0 0.0
        %313 = vmatpush1.msra.mxu0 0.0
        %314 = vmatprep.subr.mxu0 0.0
        %315 = vmatpush1.msra.mxu0 0.0
        %316 = vmatprep.subr.mxu0 0.0
        %317 = vmatpush1.msra.mxu0 0.0
        %318 = vmatprep.subr.mxu0 0.0
        %319 = vmatpush1.msra.mxu0 0.0
        %320 = vmatprep.subr.mxu0 0.0
        %321 = vmatpush1.msra.mxu0 0.0
        %322 = vmatprep.subr.mxu0 0.0
        %323 = vmatpush1.msra.mxu0 %v293
        %324 = vmatprep.subr.mxu0 0.0
        %325 = vmatpush1.msra.mxu0 %v292
        %326 = vmatprep.subr.mxu0 0.0
        %327 = vmatpush1.msra.mxu0 %v291
        %328 = vmatprep.subr.mxu0 0.0
        %329 = vmatpush1.msra.mxu0 %v290
        %330 = vmatprep.subr.mxu0 0.0
        %331 = vmatpush2.msra.mxu0 0.0
        %332 = vmatprep.subr.mxu0 0.0
        %333 = vmatpush2.msra.mxu0 0.0
        %334 = vmatprep.subr.mxu0 0.0
        %335 = vmatpush2.msra.mxu0 0.0
        %336 = vmatprep.subr.mxu0 0.0
        %337 = vmatpush2.msra.mxu0 0.0
        %338 = vmatprep.subr.mxu0 0.0
        %339 = vmatpush2.msra.mxu0 0.0
        %340 = vmatprep.subr.mxu0 0.0
        %341 = vmatpush2.msra.mxu0 0.0
        %342 = vmatprep.subr.mxu0 0.0
        %343 = vmatpush2.msra.mxu0 0.0
        %344 = vmatprep.subr.mxu0 0.0
        %345 = vmatpush2.msra.mxu0 0.0
        %346 = vmatprep.subr.mxu0 0.0
        %347 = vmatpush2.msra.mxu0 0.0
        %348 = vmatprep.subr.mxu0 0.0
        %349 = vmatpush2.msra.mxu0 0.0
        %350 = vmatprep.subr.mxu0 0.0
        %351 = vmatpush2.msra.mxu0 0.0
        %352 = vmatprep.subr.mxu0 0.0
        %353 = vmatpush2.msra.mxu0 0.0
        %354 = vmatprep.subr.mxu0 0.0
        %355 = vmatpush2.msra.mxu0 0.0
        %356 = vmatprep.subr.mxu0 0.0
        %357 = vmatpush2.msra.mxu0 0.0
        %358 = vmatprep.subr.mxu0 0.0
        %359 = vmatpush2.msra.mxu0 0.0
        %360 = vmatprep.subr.mxu0 0.0
        %361 = vmatpush2.msra.mxu0 0.0
        %362 = vmatprep.mubr.f32.mxu0 0.0
        %363 = vmatmul.mubr.f32.gmra.mxu0 %v296
        %v364 = vpop.f32.mrf.mxu0
        %v365 = vadd.f32 0.0, %v364
        %v366 = vpop.f32.mrf.mxu0
        %367 = vdwg.mxu0
        %v368 = vadd.f32 %v288, %v365
        %369 = vst.msk [vmem:[#allocation2] sm:$0xff] %vm294, %v368
        // Predicated region
        $region45: #{attention_layer_forward.6} parent=31 // pred_check
          %p370 = pneg %p282
        $region46: #{attention_layer_forward.6} parent=31 // pred_check_branch
          %372 = sbr.rel (%p370) target = $region48
        $region47: #{attention_layer_forward.6} parent=31 // pred_region
          %v373 = vld [vmem:[#allocation2] sm:$0xff]
          %v374 = vld [vmem:[#allocation5] sm:$0x1]
          %v376 = vlaneseq
          %v377 = vshrl.u32 %v376, 7
          %v378 = vsub.s32 0, %v377
          %v379 = vrot.slane %v374, %v378
          %v381 = vadd.f32 %v373, %v379
          %383 = vrot.lane.b32.xlu0 %v381, 120
          %v384 = vpop.permute.xlu0 %383
          %386 = vrot.lane.b32.xlu0 %v381, 112
          %v387 = vpop.permute.xlu0 %386
          %389 = vrot.lane.b32.xlu0 %v381, 104
          %v390 = vpop.permute.xlu0 %389
          %v392 = vcombine.low %v381, %v387
          %v393 = vcombine.high %v381, %v387
          %v395 = vunpack.c.l.s4 1983009808
          %v396 = vunpack.c.0.s8 %v395
          %v397 = vlaneseq
          %v398 = vshrl.u32 %v397, 7
          %v399 = vsub.s32 %v396, %v398
          %v400 = vrot.slane %v392, %v399
          %v402 = vunpack.c.l.s4 1983009808
          %v403 = vunpack.c.0.s8 %v402
          %v404 = vlaneseq
          %v405 = vshrl.u32 %v404, 7
          %v406 = vsub.s32 %v403, %v405
          %v407 = vrot.slane %v393, %v406
          %v408 = vcombine.low %v384, %v390
          %v409 = vcombine.high %v384, %v390
          %v411 = vunpack.c.l.s4 1983009808
          %v412 = vunpack.c.0.s8 %v411
          %v413 = vlaneseq
          %v414 = vshrl.u32 %v413, 7
          %v415 = vsub.s32 %v412, %v414
          %v416 = vrot.slane %v408, %v415
          %v418 = vunpack.c.l.s4 1983009808
          %v419 = vunpack.c.0.s8 %v418
          %v420 = vlaneseq
          %v421 = vshrl.u32 %v420, 7
          %v422 = vsub.s32 %v419, %v421
          %v423 = vrot.slane %v409, %v422
          %v424 = vcombine.low %v400, %v416
          %v425 = vcombine.high %v400, %v416
          %v427 = vunpack.c.l.s4 1934713408
          %v428 = vunpack.c.0.s8 %v427
          %v429 = vlaneseq
          %v430 = vshrl.u32 %v429, 7
          %v431 = vsub.s32 %v428, %v430
          %v432 = vrot.slane %v424, %v431
          %v434 = vunpack.c.l.s4 1934713408
          %v435 = vunpack.c.0.s8 %v434
          %v436 = vlaneseq
          %v437 = vshrl.u32 %v436, 7
          %v438 = vsub.s32 %v435, %v437
          %v439 = vrot.slane %v425, %v438
          %v440 = vcombine.low %v407, %v423
          %v441 = vcombine.high %v407, %v423
          %v443 = vunpack.c.l.s4 1934713408
          %v444 = vunpack.c.0.s8 %v443
          %v445 = vlaneseq
          %v446 = vshrl.u32 %v445, 7
          %v447 = vsub.s32 %v444, %v446
          %v448 = vrot.slane %v440, %v447
          %v450 = vunpack.c.l.s4 1934713408
          %v451 = vunpack.c.0.s8 %v450
          %v452 = vlaneseq
          %v453 = vshrl.u32 %v452, 7
          %v454 = vsub.s32 %v451, %v453
          %v455 = vrot.slane %v441, %v454
          %v456 = vcombine.high %v432, 0.0
          %v457 = vcombine.high %v439, 0.0
          %v458 = vcombine.high %v448, 0.0
          %v459 = vcombine.high %v455, 0.0
          %v460 = vcombine.low %v432, %v439
          %v462 = vunpack.c.l.s4 1983009808
          %v463 = vunpack.c.0.s8 %v462
          %v464 = vlaneseq
          %v465 = vshrl.u32 %v464, 7
          %v466 = vsub.s32 %v463, %v465
          %v467 = vrot.slane %v460, %v466
          %v468 = vcombine.low %v456, %v457
          %v470 = vunpack.c.l.s4 1983009808
          %v471 = vunpack.c.0.s8 %v470
          %v472 = vlaneseq
          %v473 = vshrl.u32 %v472, 7
          %v474 = vsub.s32 %v471, %v473
          %v475 = vrot.slane %v468, %v474
          %v476 = vcombine.low %v448, %v455
          %v478 = vunpack.c.l.s4 1983009808
          %v479 = vunpack.c.0.s8 %v478
          %v480 = vlaneseq
          %v481 = vshrl.u32 %v480, 7
          %v482 = vsub.s32 %v479, %v481
          %v483 = vrot.slane %v476, %v482
          %v484 = vcombine.low %v458, %v459
          %v486 = vunpack.c.l.s4 1983009808
          %v487 = vunpack.c.0.s8 %v486
          %v488 = vlaneseq
          %v489 = vshrl.u32 %v488, 7
          %v490 = vsub.s32 %v487, %v489
          %v491 = vrot.slane %v484, %v490
          %v492 = vcombine.low %v467, %v475
          %v493 = vcombine.high %v467, %v475
          %v495 = vunpack.c.l.s4 1934713408
          %v496 = vunpack.c.0.s8 %v495
          %v497 = vlaneseq
          %v498 = vshrl.u32 %v497, 7
          %v499 = vsub.s32 %v496, %v498
          %v500 = vrot.slane %v492, %v499
          %v502 = vunpack.c.l.s4 1934713408
          %v503 = vunpack.c.0.s8 %v502
          %v504 = vlaneseq
          %v505 = vshrl.u32 %v504, 7
          %v506 = vsub.s32 %v503, %v505
          %v507 = vrot.slane %v493, %v506
          %v508 = vcombine.low %v483, %v491
          %v509 = vcombine.high %v483, %v491
          %v511 = vunpack.c.l.s4 1934713408
          %v512 = vunpack.c.0.s8 %v511
          %v513 = vlaneseq
          %v514 = vshrl.u32 %v513, 7
          %v515 = vsub.s32 %v512, %v514
          %v516 = vrot.slane %v508, %v515
          %v518 = vunpack.c.l.s4 1934713408
          %v519 = vunpack.c.0.s8 %v518
          %v520 = vlaneseq
          %v521 = vshrl.u32 %v520, 7
          %v522 = vsub.s32 %v519, %v521
          %v523 = vrot.slane %v509, %v522
          %v524 = vcombine.low %v500, %v516
          %v525 = vcombine.high %v500, %v516
          %v526 = vcombine.low %v507, %v523
          %v527 = vcombine.high %v507, %v523
          %vm528 = vcmask 64512
          %529 = vst.msk [vmem:[%s280] sm:$0xff] %vm528, %v524
          %530 = vst.msk [vmem:[%s280 + $0x8] sm:$0xff] %vm528, %v525
          %531 = vst.msk [vmem:[%s280 + $0x10] sm:$0xff] %vm528, %v526
          %532 = vst.msk [vmem:[%s280 + $0x18] sm:$0xff] %vm528, %v527
        $region48: #{attention_layer_forward.6} parent=31 // pred_fallthru
          _
        %s533 = smul.u32 4, %s24
        %p534 = scmp.lt.s32.totalorder %s22, 1
        %s535 = scalar_select %p534, %s22, 1
        %p536 = scmp.lt.s32.totalorder %s533, 3
        %s537 = scalar_select %p536, %s533, 3
        %p538 = scmp.lt.s32.totalorder %s23, 0
        %s539 = scalar_select %p538, %s23, 0
        %s540 = sadd.s32 %s539, %s537
        %s541 = smul.addr %s535, 4
        %s542 = sadd.s32 %s540, %s541
        %s543 = smul.addr %s542, 8
        %s544 = scalar_lea.vmem %s3, %s543
        // Predicated region
        $region49: #{attention_layer_forward.6} parent=31 // pred_check
          %p545 = pneg %p148
        $region50: #{attention_layer_forward.6} parent=31 // pred_check_branch
          %547 = sbr.rel (%p545) target = $region52
        $region51: #{attention_layer_forward.6} parent=31 // pred_region
          %s548 = smul.u32 4, %s24
        $region52: #{attention_layer_forward.6} parent=31 // pred_fallthru
          _
      $region32: #{attention_layer_forward.6} parent=5 // pred_fallthru
        _
      %p549 = scmp.le.s32.totalorder 2, %s11
      // Predicated region
      $region53: #{attention_layer_forward.6} parent=5 // pred_check
        %p550 = pneg %p549
      $region54: #{attention_layer_forward.6} parent=5 // pred_check_branch
        %552 = sbr.rel (%p550) target = $region56
      $region55: #{attention_layer_forward.6} parent=5 // pred_region
        %s553 = ssub.s32 %s11, 2
        // Predicated region
        $region57: #{attention_layer_forward.6} parent=55 // pred_check
          %p554 = pneg %p154
        $region58: #{attention_layer_forward.6} parent=55 // pred_check_branch
          %556 = sbr.rel (%p554) target = $region60
        $region59: #{attention_layer_forward.6} parent=55 // pred_region
          %s557 = smul.u32 4, %s28
          %p558 = scmp.lt.s32.totalorder %s26, 1
          %s559 = scalar_select %p558, %s26, 1
          %p560 = scmp.lt.s32.totalorder %s557, 3
          %s561 = scalar_select %p560, %s557, 3
          %p562 = scmp.lt.s32.totalorder %s27, 0
          %s563 = scalar_select %p562, %s27, 0
          %s564 = sadd.s32 %s563, %s561
          %s565 = smul.addr %s559, 4
          %s566 = sadd.s32 %s564, %s565
          %s567 = smul.addr %s566, 8
          %s568 = scalar_lea.vmem %s3, %s567
        $region60: #{attention_layer_forward.6} parent=55 // pred_fallthru
          _
      $region56: #{attention_layer_forward.6} parent=5 // pred_fallthru
        _
    $region6: #{attention_layer_forward.6} parent=1 // loop_footer
      %s15 = sadd.s32 1, %s11
    $region7: #{attention_layer_forward.6} parent=1 // loop_footer_branch
      %10 = sbr.rel target = $region3
    $region8: #{attention_layer_forward.6} parent=1 // loop_exit
      _
    %569 = vsyncpa [#allocation4], 1
    %s570 = scalar_lea.sflag [#allocation4], 1
    %571 = vsyncpa %s570, 1
    %572 = vsyncpa [#allocation6], 1

// kernel: attention_layer_forward.5
$region0: #{attention_layer_forward.5}
  #allocation0 [shape = 'u32[]', space=smem, size = 0x4, offset = 0x4, fixed_abs, tag = 'smem constant byte address 0x4 - core index']
  #allocation1 [shape = 'u32[144,128]{1,0:T(1,128)}', space=vmem, size = 0x12000, scoped, tag = 'internal scratch']
  #allocation2 [shape = 'f32[8,32]{1,0:T(8,128)}', space=vmem, size = 0x1000, scoped, tag = 'scratch operand']
  %s0 = inlined_call_operand.vmem [shape: f32[2,8,32], index: 0, kind: input, shape index: {}]
  %s1 = inlined_call_operand.vmem [shape: f32[32,32], index: 1, kind: input, shape index: {}]
  %s2 = inlined_call_operand.vmem [shape: f32[1,32], index: 2, kind: input, shape index: {}]
  %s3 = inlined_call_operand.vmem [shape: f32[2,4,8,8], index: 3, kind: output, shape index: {}]
  %s4 = sld [smem:[#allocation0]]
  $region53: #{attention_layer_forward.5} parent=0
    _
  %s6 = ssub.s32 1, %s4
  %s7 = scalar_select 0, %s6, %s4
  loop: start=0, step=1, limit=4
  $region2: #{attention_layer_forward.5} parent=0 // loop_pre_header
    _
  $region3: #{attention_layer_forward.5} parent=0 // loop_header
    %s9 = sphi 0, %s13
    %p10 = scmp.ge.s32.totalorder %s9, 4
    %s16 = sphi 0, %s42
    %s17 = sphi 0, %s38
    %s18 = sphi 0, %s34
    %s19 = sphi 0, %s30
    %s20 = sphi 0, %s16
    %s21 = sphi 0, %s17
    %s22 = sphi 0, %s18
    %s23 = sphi 0, %s19
    %s24 = sphi 0, %s20
    %s25 = sphi 0, %s21
    %s26 = sphi 0, %s22
    %s27 = sphi 0, %s23
    %s49 = sphi 0, %s51
    %s52 = sphi 0, %s49
    %s53 = sphi 0, %s52
    %s69 = sphi 0, %s53
    %s77 = sphi 0, %s79
    %s80 = sphi 0, %s77
    %s81 = sphi 0, %s80
    %s97 = sphi 0, %s81
    %s103 = sphi 0, %s105
    %s106 = sphi 0, %s103
    %s107 = sphi 0, %s106
    %s123 = sphi 0, %s107
    %s133 = sphi 0, %s135
    %s136 = sphi 0, %s133
    %s137 = sphi 0, %s136
    %s153 = sphi 0, %s137
  $region4: #{attention_layer_forward.5} parent=0 // loop_header_branch
    %12 = sbr.rel (%p10) target = $region8
  $region5: #{attention_layer_forward.5} parent=0 // loop_body
    %s14 = ssub.s32 %s9, 1
    %s15 = ssub.s32 %s9, 2
    %s28 = sadd.s32 1, %s19
    %p29 = scmp.ge.s32.totalorder %s28, 1
    %s30 = scalar_select %p29, 0, %s28
    %s31 = sadd.s32 1, %s18
    %s32 = scalar_select %p29, %s31, %s18
    %p33 = scmp.ge.s32.totalorder %s32, 1
    %s34 = scalar_select %p33, 0, %s32
    %s35 = sadd.s32 1, %s17
    %s36 = scalar_select %p33, %s35, %s17
    %p37 = scmp.ge.s32.totalorder %s36, 1
    %s38 = scalar_select %p37, 0, %s36
    %s39 = sadd.s32 1, %s16
    %s40 = scalar_select %p37, %s39, %s16
    %p41 = scmp.ge.s32.totalorder %s40, 2
    %s42 = scalar_select %p41, 0, %s40
    %s43 = ssub.s32 %s16, %s42
    %s44 = ssub.s32 %s17, %s38
    %s45 = sor.u32 %s43, %s44
    %s46 = ssub.s32 %s19, %s30
    %s47 = sor.u32 %s45, %s46
    %p48 = scmp.eq.s32.totalorder %s47, 0
    %s50 = sadd.s32 %s49, 1
    %s51 = scalar_select %p48, %s49, %s50
    %p54 = pneg %p48
    %p55 = scmp.eq.s32.totalorder %s9, 1
    %p56 = por %p54, %p55
    %p57 = scmp.ne.s32.totalorder %s49, %s52
    %p58 = scmp.eq.s32.totalorder %s9, 0
    %p59 = por %p57, %p58
    %p60 = scmp.ne.s32.totalorder %s49, %s52
    %p61 = scmp.eq.s32.totalorder %s14, 1
    %p62 = por %p60, %p61
    %p63 = scmp.ne.s32.totalorder %s52, %s53
    %p64 = scmp.eq.s32.totalorder %s14, 0
    %p65 = por %p63, %p64
    %p66 = scmp.ne.s32.totalorder %s52, %s53
    %p67 = scmp.eq.s32.totalorder %s15, 1
    %p68 = por %p66, %p67
    %p70 = scmp.ne.s32.totalorder %s53, %s69
    %p71 = scmp.eq.s32.totalorder %s15, 0
    %p72 = por %p70, %p71
    %s73 = ssub.s32 %s19, %s30
    %s74 = ssub.s32 %s18, %s34
    %s75 = sor.u32 %s73, %s74
    %p76 = scmp.eq.s32.totalorder %s75, 0
    %s78 = sadd.s32 %s77, 1
    %s79 = scalar_select %p76, %s77, %s78
    %p82 = pneg %p76
    %p83 = scmp.eq.s32.totalorder %s9, 1
    %p84 = por %p82, %p83
    %p85 = scmp.ne.s32.totalorder %s77, %s80
    %p86 = scmp.eq.s32.totalorder %s9, 0
    %p87 = por %p85, %p86
    %p88 = scmp.ne.s32.totalorder %s77, %s80
    %p89 = scmp.eq.s32.totalorder %s14, 1
    %p90 = por %p88, %p89
    %p91 = scmp.ne.s32.totalorder %s80, %s81
    %p92 = scmp.eq.s32.totalorder %s14, 0
    %p93 = por %p91, %p92
    %p94 = scmp.ne.s32.totalorder %s80, %s81
    %p95 = scmp.eq.s32.totalorder %s15, 1
    %p96 = por %p94, %p95
    %p98 = scmp.ne.s32.totalorder %s81, %s97
    %p99 = scmp.eq.s32.totalorder %s15, 0
    %p100 = por %p98, %p99
    %s101 = ssub.s32 %s18, %s34
    %p102 = scmp.eq.s32.totalorder %s101, 0
    %s104 = sadd.s32 %s103, 1
    %s105 = scalar_select %p102, %s103, %s104
    %p108 = pneg %p102
    %p109 = scmp.eq.s32.totalorder %s9, 1
    %p110 = por %p108, %p109
    %p111 = scmp.ne.s32.totalorder %s103, %s106
    %p112 = scmp.eq.s32.totalorder %s9, 0
    %p113 = por %p111, %p112
    %p114 = scmp.ne.s32.totalorder %s103, %s106
    %p115 = scmp.eq.s32.totalorder %s14, 1
    %p116 = por %p114, %p115
    %p117 = scmp.ne.s32.totalorder %s106, %s107
    %p118 = scmp.eq.s32.totalorder %s14, 0
    %p119 = por %p117, %p118
    %p120 = scmp.ne.s32.totalorder %s106, %s107
    %p121 = scmp.eq.s32.totalorder %s15, 1
    %p122 = por %p120, %p121
    %p124 = scmp.ne.s32.totalorder %s107, %s123
    %p125 = scmp.eq.s32.totalorder %s15, 0
    %p126 = por %p124, %p125
    %s127 = ssub.s32 %s16, %s42
    %s128 = ssub.s32 %s18, %s34
    %s129 = sor.u32 %s127, %s128
    %s130 = ssub.s32 %s17, %s38
    %s131 = sor.u32 %s129, %s130
    %p132 = scmp.eq.s32.totalorder %s131, 0
    %s134 = sadd.s32 %s133, 1
    %s135 = scalar_select %p132, %s133, %s134
    %p138 = pneg %p132
    %p139 = scmp.eq.s32.totalorder %s9, 1
    %p140 = por %p138, %p139
    %p141 = scmp.ne.s32.totalorder %s133, %s136
    %p142 = scmp.eq.s32.totalorder %s9, 0
    %p143 = por %p141, %p142
    %p144 = scmp.ne.s32.totalorder %s133, %s136
    %p145 = scmp.eq.s32.totalorder %s14, 1
    %p146 = por %p144, %p145
    %p147 = scmp.ne.s32.totalorder %s136, %s137
    %p148 = scmp.eq.s32.totalorder %s14, 0
    %p149 = por %p147, %p148
    %p150 = scmp.ne.s32.totalorder %s136, %s137
    %p151 = scmp.eq.s32.totalorder %s15, 1
    %p152 = por %p150, %p151
    %p154 = scmp.ne.s32.totalorder %s137, %s153
    %p155 = scmp.eq.s32.totalorder %s15, 0
    %p156 = por %p154, %p155
    %p157 = scmp.le.s32.totalorder 1, %s9
    %p158 = scmp.lt.s32.totalorder %s9, 3
    %p159 = pnand %p157, %p158
    %p160 = pneg %p159
    // Predicated region
    $region9: #{attention_layer_forward.5} parent=5 // pred_check
      _
    $region10: #{attention_layer_forward.5} parent=5 // pred_check_branch
      %162 = sbr.rel (%p159) target = $region12
    $region11: #{attention_layer_forward.5} parent=5 // pred_region
      %s163 = ssub.s32 %s9, 1
      // Predicated region
      $region13: #{attention_layer_forward.5} parent=11 // pred_check
        %p164 = pneg %p93
      $region14: #{attention_layer_forward.5} parent=11 // pred_check_branch
        %166 = sbr.rel (%p164) target = $region16
      $region15: #{attention_layer_forward.5} parent=11 // pred_region
        %s167 = smul.u32 4, %s23
        %p168 = scmp.lt.s32.totalorder %s167, 3
        %s169 = scalar_select %p168, %s167, 3
        %p170 = scmp.lt.s32.totalorder %s22, 0
        %s171 = scalar_select %p170, %s22, 0
        %s172 = sadd.s32 %s171, %s169
        %s173 = smul.addr %s172, 8
        %s174 = scalar_lea.vmem %s1, %s173
        %s175 = smul.u32 4, %s23
      $region16: #{attention_layer_forward.5} parent=11 // pred_fallthru
        _
      // Predicated region
      $region17: #{attention_layer_forward.5} parent=11 // pred_check
        %p176 = pneg %p119
      $region18: #{attention_layer_forward.5} parent=11 // pred_check_branch
        %178 = sbr.rel (%p176) target = $region20
      $region19: #{attention_layer_forward.5} parent=11 // pred_region
        %p179 = scmp.lt.s32.totalorder %s22, 0
        %s180 = scalar_select %p179, %s22, 0
        %s181 = scalar_lea.vmem %s2, %s180
      $region20: #{attention_layer_forward.5} parent=11 // pred_fallthru
        _
    $region12: #{attention_layer_forward.5} parent=5 // pred_fallthru
      _
    %p182 = scmp.lt.s32.totalorder %s9, 2
    // Predicated region
    $region21: #{attention_layer_forward.5} parent=5 // pred_check
      %p183 = pneg %p182
    $region22: #{attention_layer_forward.5} parent=5 // pred_check_branch
      %185 = sbr.rel (%p183) target = $region24
    $region23: #{attention_layer_forward.5} parent=5 // pred_region
      // Predicated region
      $region25: #{attention_layer_forward.5} parent=23 // pred_check
        %p186 = pneg %p59
      $region26: #{attention_layer_forward.5} parent=23 // pred_check_branch
        %188 = sbr.rel (%p186) target = $region28
      $region27: #{attention_layer_forward.5} parent=23 // pred_region
        %p189 = scmp.lt.s32.totalorder %s16, 1
        %s190 = scalar_select %p189, %s16, 1
        %p191 = scmp.lt.s32.totalorder %s17, 0
        %s192 = scalar_select %p191, %s17, 0
        %p193 = scmp.lt.s32.totalorder %s19, 0
        %s194 = scalar_select %p193, %s19, 0
        %s195 = sadd.s32 %s194, %s192
        %s196 = sadd.s32 %s195, %s190
        %s197 = smul.addr %s196, 8
        %s198 = scalar_lea.vmem %s0, %s197
      $region28: #{attention_layer_forward.5} parent=23 // pred_fallthru
        _
    $region24: #{attention_layer_forward.5} parent=5 // pred_fallthru
      _
    %p199 = scmp.le.s32.totalorder 1, %s9
    %p200 = scmp.lt.s32.totalorder %s9, 3
    %p201 = pnand %p199, %p200
    %p202 = pneg %p201
    // Predicated region
    $region29: #{attention_layer_forward.5} parent=5 // pred_check
      _
    $region30: #{attention_layer_forward.5} parent=5 // pred_check_branch
      %204 = sbr.rel (%p201) target = $region32
    $region31: #{attention_layer_forward.5} parent=5 // pred_region
      %s205 = ssub.s32 %s9, 1
      %p206 = scmp.lt.s32.totalorder %s20, 1
      %s207 = scalar_select %p206, %s20, 1
      %p208 = scmp.lt.s32.totalorder %s21, 0
      %s209 = scalar_select %p208, %s21, 0
      %p210 = scmp.lt.s32.totalorder %s23, 0
      %s211 = scalar_select %p210, %s23, 0
      %s212 = sadd.s32 %s211, %s209
      %s213 = sadd.s32 %s212, %s207
      %s214 = smul.addr %s213, 8
      %s215 = scalar_lea.vmem %s0, %s214
      %p216 = pneg %p65
      %p217 = pneg %p62
      %s218 = smul.u32 4, %s23
      %p219 = scmp.lt.s32.totalorder %s218, 3
      %s220 = scalar_select %p219, %s218, 3
      %p221 = scmp.lt.s32.totalorder %s22, 0
      %s222 = scalar_select %p221, %s22, 0
      %s223 = sadd.s32 %s222, %s220
      %s224 = smul.addr %s223, 8
      %s225 = scalar_lea.vmem %s1, %s224
      %p226 = pneg %p93
      %p227 = pneg %p90
      %p228 = scmp.lt.s32.totalorder %s22, 0
      %s229 = scalar_select %p228, %s22, 0
      %s230 = scalar_lea.vmem %s2, %s229
      %p231 = pneg %p119
      %p232 = pneg %p116
      %p233 = pneg %p149
      %p234 = pneg %p146
      %s235 = smul.u32 4, %s22
      %p236 = scmp.lt.s32.totalorder %s20, 1
      %s237 = scalar_select %p236, %s20, 1
      %p238 = scmp.lt.s32.totalorder %s235, 3
      %s239 = scalar_select %p238, %s235, 3
      %p240 = scmp.lt.s32.totalorder %s21, 0
      %s241 = scalar_select %p240, %s21, 0
      %s242 = sadd.s32 %s241, %s239
      %s243 = smul.addr %s237, 4
      %s244 = sadd.s32 %s242, %s243
      %s245 = smul.addr %s244, 8
      %s246 = scalar_lea.vmem %s3, %s245
      %p247 = scmp.lt.s32.totalorder %s20, 1
      %s248 = scalar_select %p247, %s20, 1
      %p249 = scmp.lt.s32.totalorder %s21, 0
      %s250 = scalar_select %p249, %s21, 0
      %p251 = scmp.lt.s32.totalorder %s23, 0
      %s252 = scalar_select %p251, %s23, 0
      %s253 = sadd.s32 %s252, %s250
      %s254 = sadd.s32 %s253, %s248
      %s255 = smul.addr %s254, 8
      %s256 = scalar_lea.vmem %s0, %s255
      %s257 = smul.u32 4, %s23
      %p258 = scmp.lt.s32.totalorder %s257, 3
      %s259 = scalar_select %p258, %s257, 3
      %p260 = scmp.lt.s32.totalorder %s22, 0
      %s261 = scalar_select %p260, %s22, 0
      %s262 = sadd.s32 %s261, %s259
      %s263 = smul.addr %s262, 8
      %s264 = scalar_lea.vmem %s1, %s263
      %s265 = smul.u32 4, %s23
      %p266 = scmp.lt.s32.totalorder %s22, 0
      %s267 = scalar_select %p266, %s22, 0
      %s268 = scalar_lea.vmem %s2, %s267
      %s269 = smul.u32 4, %s22
      %p270 = scmp.lt.s32.totalorder %s20, 1
      %s271 = scalar_select %p270, %s20, 1
      %p272 = scmp.lt.s32.totalorder %s269, 3
      %s273 = scalar_select %p272, %s269, 3
      %p274 = scmp.lt.s32.totalorder %s21, 0
      %s275 = scalar_select %p274, %s21, 0
      %s276 = sadd.s32 %s275, %s273
      %s277 = smul.addr %s271, 4
      %s278 = sadd.s32 %s276, %s277
      %s279 = smul.addr %s278, 8
      %s280 = scalar_lea.vmem %s3, %s279
      %s281 = smul.u32 4, %s22
      %p282 = scmp.eq.s32.totalorder %s23, 0
      // Predicated region
      $region33: #{attention_layer_forward.5} parent=31 // pred_check
        %p283 = pneg %p282
      $region34: #{attention_layer_forward.5} parent=31 // pred_check_branch
        %285 = sbr.rel (%p283) target = $region36
      $region35: #{attention_layer_forward.5} parent=31 // pred_region
        %vm286 = vcmask 261120
        %287 = vst.msk [vmem:[#allocation2] sm:$0xff] %vm286, 0.0
      $region36: #{attention_layer_forward.5} parent=31 // pred_fallthru
        _
      %v288 = vld [vmem:[#allocation2] sm:$0xff]
      %v289 = vld [vmem:[%s256] sm:$0xff]
      %v290 = vld [vmem:[%s264] sm:$0xff]
      %v291 = vld [vmem:[%s264 + $0x8] sm:$0xff]
      %v292 = vld [vmem:[%s264 + $0x10] sm:$0xff]
      %v293 = vld [vmem:[%s264 + $0x18] sm:$0xff]
      %vm294 = vcmask 261120
      %v296 = vsel %vm294, %v289, 0
      %298 = vmatprep.subr.mxu0 0.0
      %299 = vmatpush1.msra.mxu0 0.0
      %300 = vmatprep.subr.mxu0 0.0
      %301 = vmatpush1.msra.mxu0 0.0
      %302 = vmatprep.subr.mxu0 0.0
      %303 = vmatpush1.msra.mxu0 0.0
      %304 = vmatprep.subr.mxu0 0.0
      %305 = vmatpush1.msra.mxu0 0.0
      %306 = vmatprep.subr.mxu0 0.0
      %307 = vmatpush1.msra.mxu0 0.0
      %308 = vmatprep.subr.mxu0 0.0
      %309 = vmatpush1.msra.mxu0 0.0
      %310 = vmatprep.subr.mxu0 0.0
      %311 = vmatpush1.msra.mxu0 0.0
      %312 = vmatprep.subr.mxu0 0.0
      %313 = vmatpush1.msra.mxu0 0.0
      %314 = vmatprep.subr.mxu0 0.0
      %315 = vmatpush1.msra.mxu0 0.0
      %316 = vmatprep.subr.mxu0 0.0
      %317 = vmatpush1.msra.mxu0 0.0
      %318 = vmatprep.subr.mxu0 0.0
      %319 = vmatpush1.msra.mxu0 0.0
      %320 = vmatprep.subr.mxu0 0.0
      %321 = vmatpush1.msra.mxu0 0.0
      %322 = vmatprep.subr.mxu0 0.0
      %323 = vmatpush1.msra.mxu0 %v293
      %324 = vmatprep.subr.mxu0 0.0
      %325 = vmatpush1.msra.mxu0 %v292
      %326 = vmatprep.subr.mxu0 0.0
      %327 = vmatpush1.msra.mxu0 %v291
      %328 = vmatprep.subr.mxu0 0.0
      %329 = vmatpush1.msra.mxu0 %v290
      %330 = vmatprep.subr.mxu0 0.0
      %331 = vmatpush2.msra.mxu0 0.0
      %332 = vmatprep.subr.mxu0 0.0
      %333 = vmatpush2.msra.mxu0 0.0
      %334 = vmatprep.subr.mxu0 0.0
      %335 = vmatpush2.msra.mxu0 0.0
      %336 = vmatprep.subr.mxu0 0.0
      %337 = vmatpush2.msra.mxu0 0.0
      %338 = vmatprep.subr.mxu0 0.0
      %339 = vmatpush2.msra.mxu0 0.0
      %340 = vmatprep.subr.mxu0 0.0
      %341 = vmatpush2.msra.mxu0 0.0
      %342 = vmatprep.subr.mxu0 0.0
      %343 = vmatpush2.msra.mxu0 0.0
      %344 = vmatprep.subr.mxu0 0.0
      %345 = vmatpush2.msra.mxu0 0.0
      %346 = vmatprep.subr.mxu0 0.0
      %347 = vmatpush2.msra.mxu0 0.0
      %348 = vmatprep.subr.mxu0 0.0
      %349 = vmatpush2.msra.mxu0 0.0
      %350 = vmatprep.subr.mxu0 0.0
      %351 = vmatpush2.msra.mxu0 0.0
      %352 = vmatprep.subr.mxu0 0.0
      %353 = vmatpush2.msra.mxu0 0.0
      %354 = vmatprep.subr.mxu0 0.0
      %355 = vmatpush2.msra.mxu0 0.0
      %356 = vmatprep.subr.mxu0 0.0
      %357 = vmatpush2.msra.mxu0 0.0
      %358 = vmatprep.subr.mxu0 0.0
      %359 = vmatpush2.msra.mxu0 0.0
      %360 = vmatprep.subr.mxu0 0.0
      %361 = vmatpush2.msra.mxu0 0.0
      %362 = vmatprep.mubr.f32.mxu0 0.0
      %363 = vmatmul.mubr.f32.gmra.mxu0 %v296
      %v364 = vpop.f32.mrf.mxu0
      %v365 = vadd.f32 0.0, %v364
      %v366 = vpop.f32.mrf.mxu0
      %367 = vdwg.mxu0
      %v368 = vadd.f32 %v288, %v365
      %369 = vst.msk [vmem:[#allocation2] sm:$0xff] %vm294, %v368
      // Predicated region
      $region37: #{attention_layer_forward.5} parent=31 // pred_check
        %p370 = pneg %p282
      $region38: #{attention_layer_forward.5} parent=31 // pred_check_branch
        %372 = sbr.rel (%p370) target = $region40
      $region39: #{attention_layer_forward.5} parent=31 // pred_region
        %v373 = vld [vmem:[#allocation2] sm:$0xff]
        %v374 = vld [vmem:[%s268] sm:$0x1]
        %v376 = vlaneseq
        %v377 = vshrl.u32 %v376, 7
        %v378 = vsub.s32 0, %v377
        %v379 = vrot.slane %v374, %v378
        %v381 = vadd.f32 %v373, %v379
        %383 = vrot.lane.b32.xlu0 %v381, 120
        %v384 = vpop.permute.xlu0 %383
        %386 = vrot.lane.b32.xlu0 %v381, 112
        %v387 = vpop.permute.xlu0 %386
        %389 = vrot.lane.b32.xlu0 %v381, 104
        %v390 = vpop.permute.xlu0 %389
        %v392 = vcombine.low %v381, %v387
        %v393 = vcombine.high %v381, %v387
        %v395 = vunpack.c.l.s4 1983009808
        %v396 = vunpack.c.0.s8 %v395
        %v397 = vlaneseq
        %v398 = vshrl.u32 %v397, 7
        %v399 = vsub.s32 %v396, %v398
        %v400 = vrot.slane %v392, %v399
        %v402 = vunpack.c.l.s4 1983009808
        %v403 = vunpack.c.0.s8 %v402
        %v404 = vlaneseq
        %v405 = vshrl.u32 %v404, 7
        %v406 = vsub.s32 %v403, %v405
        %v407 = vrot.slane %v393, %v406
        %v408 = vcombine.low %v384, %v390
        %v409 = vcombine.high %v384, %v390
        %v411 = vunpack.c.l.s4 1983009808
        %v412 = vunpack.c.0.s8 %v411
        %v413 = vlaneseq
        %v414 = vshrl.u32 %v413, 7
        %v415 = vsub.s32 %v412, %v414
        %v416 = vrot.slane %v408, %v415
        %v418 = vunpack.c.l.s4 1983009808
        %v419 = vunpack.c.0.s8 %v418
        %v420 = vlaneseq
        %v421 = vshrl.u32 %v420, 7
        %v422 = vsub.s32 %v419, %v421
        %v423 = vrot.slane %v409, %v422
        %v424 = vcombine.low %v400, %v416
        %v425 = vcombine.high %v400, %v416
        %v427 = vunpack.c.l.s4 1934713408
        %v428 = vunpack.c.0.s8 %v427
        %v429 = vlaneseq
        %v430 = vshrl.u32 %v429, 7
        %v431 = vsub.s32 %v428, %v430
        %v432 = vrot.slane %v424, %v431
        %v434 = vunpack.c.l.s4 1934713408
        %v435 = vunpack.c.0.s8 %v434
        %v436 = vlaneseq
        %v437 = vshrl.u32 %v436, 7
        %v438 = vsub.s32 %v435, %v437
        %v439 = vrot.slane %v425, %v438
        %v440 = vcombine.low %v407, %v423
        %v441 = vcombine.high %v407, %v423
        %v443 = vunpack.c.l.s4 1934713408
        %v444 = vunpack.c.0.s8 %v443
        %v445 = vlaneseq
        %v446 = vshrl.u32 %v445, 7
        %v447 = vsub.s32 %v444, %v446
        %v448 = vrot.slane %v440, %v447
        %v450 = vunpack.c.l.s4 1934713408
        %v451 = vunpack.c.0.s8 %v450
        %v452 = vlaneseq
        %v453 = vshrl.u32 %v452, 7
        %v454 = vsub.s32 %v451, %v453
        %v455 = vrot.slane %v441, %v454
        %v456 = vcombine.high %v432, 0.0
        %v457 = vcombine.high %v439, 0.0
        %v458 = vcombine.high %v448, 0.0
        %v459 = vcombine.high %v455, 0.0
        %v460 = vcombine.low %v432, %v439
        %v462 = vunpack.c.l.s4 1983009808
        %v463 = vunpack.c.0.s8 %v462
        %v464 = vlaneseq
        %v465 = vshrl.u32 %v464, 7
        %v466 = vsub.s32 %v463, %v465
        %v467 = vrot.slane %v460, %v466
        %v468 = vcombine.low %v456, %v457
        %v470 = vunpack.c.l.s4 1983009808
        %v471 = vunpack.c.0.s8 %v470
        %v472 = vlaneseq
        %v473 = vshrl.u32 %v472, 7
        %v474 = vsub.s32 %v471, %v473
        %v475 = vrot.slane %v468, %v474
        %v476 = vcombine.low %v448, %v455
        %v478 = vunpack.c.l.s4 1983009808
        %v479 = vunpack.c.0.s8 %v478
        %v480 = vlaneseq
        %v481 = vshrl.u32 %v480, 7
        %v482 = vsub.s32 %v479, %v481
        %v483 = vrot.slane %v476, %v482
        %v484 = vcombine.low %v458, %v459
        %v486 = vunpack.c.l.s4 1983009808
        %v487 = vunpack.c.0.s8 %v486
        %v488 = vlaneseq
        %v489 = vshrl.u32 %v488, 7
        %v490 = vsub.s32 %v487, %v489
        %v491 = vrot.slane %v484, %v490
        %v492 = vcombine.low %v467, %v475
        %v493 = vcombine.high %v467, %v475
        %v495 = vunpack.c.l.s4 1934713408
        %v496 = vunpack.c.0.s8 %v495
        %v497 = vlaneseq
        %v498 = vshrl.u32 %v497, 7
        %v499 = vsub.s32 %v496, %v498
        %v500 = vrot.slane %v492, %v499
        %v502 = vunpack.c.l.s4 1934713408
        %v503 = vunpack.c.0.s8 %v502
        %v504 = vlaneseq
        %v505 = vshrl.u32 %v504, 7
        %v506 = vsub.s32 %v503, %v505
        %v507 = vrot.slane %v493, %v506
        %v508 = vcombine.low %v483, %v491
        %v509 = vcombine.high %v483, %v491
        %v511 = vunpack.c.l.s4 1934713408
        %v512 = vunpack.c.0.s8 %v511
        %v513 = vlaneseq
        %v514 = vshrl.u32 %v513, 7
        %v515 = vsub.s32 %v512, %v514
        %v516 = vrot.slane %v508, %v515
        %v518 = vunpack.c.l.s4 1934713408
        %v519 = vunpack.c.0.s8 %v518
        %v520 = vlaneseq
        %v521 = vshrl.u32 %v520, 7
        %v522 = vsub.s32 %v519, %v521
        %v523 = vrot.slane %v509, %v522
        %v524 = vcombine.low %v500, %v516
        %v525 = vcombine.high %v500, %v516
        %v526 = vcombine.low %v507, %v523
        %v527 = vcombine.high %v507, %v523
        %vm528 = vcmask 64512
        %529 = vst.msk [vmem:[%s280] sm:$0xff] %vm528, %v524
        %530 = vst.msk [vmem:[%s280 + $0x8] sm:$0xff] %vm528, %v525
        %531 = vst.msk [vmem:[%s280 + $0x10] sm:$0xff] %vm528, %v526
        %532 = vst.msk [vmem:[%s280 + $0x18] sm:$0xff] %vm528, %v527
      $region40: #{attention_layer_forward.5} parent=31 // pred_fallthru
        _
      %s533 = smul.u32 4, %s22
      %p534 = scmp.lt.s32.totalorder %s20, 1
      %s535 = scalar_select %p534, %s20, 1
      %p536 = scmp.lt.s32.totalorder %s533, 3
      %s537 = scalar_select %p536, %s533, 3
      %p538 = scmp.lt.s32.totalorder %s21, 0
      %s539 = scalar_select %p538, %s21, 0
      %s540 = sadd.s32 %s539, %s537
      %s541 = smul.addr %s535, 4
      %s542 = sadd.s32 %s540, %s541
      %s543 = smul.addr %s542, 8
      %s544 = scalar_lea.vmem %s3, %s543
      // Predicated region
      $region41: #{attention_layer_forward.5} parent=31 // pred_check
        %p545 = pneg %p146
      $region42: #{attention_layer_forward.5} parent=31 // pred_check_branch
        %547 = sbr.rel (%p545) target = $region44
      $region43: #{attention_layer_forward.5} parent=31 // pred_region
        %s548 = smul.u32 4, %s22
      $region44: #{attention_layer_forward.5} parent=31 // pred_fallthru
        _
    $region32: #{attention_layer_forward.5} parent=5 // pred_fallthru
      _
    %p549 = scmp.le.s32.totalorder 2, %s9
    // Predicated region
    $region45: #{attention_layer_forward.5} parent=5 // pred_check
      %p550 = pneg %p549
    $region46: #{attention_layer_forward.5} parent=5 // pred_check_branch
      %552 = sbr.rel (%p550) target = $region48
    $region47: #{attention_layer_forward.5} parent=5 // pred_region
      %s553 = ssub.s32 %s9, 2
      // Predicated region
      $region49: #{attention_layer_forward.5} parent=47 // pred_check
        %p554 = pneg %p152
      $region50: #{attention_layer_forward.5} parent=47 // pred_check_branch
        %556 = sbr.rel (%p554) target = $region52
      $region51: #{attention_layer_forward.5} parent=47 // pred_region
        %s557 = smul.u32 4, %s26
        %p558 = scmp.lt.s32.totalorder %s24, 1
        %s559 = scalar_select %p558, %s24, 1
        %p560 = scmp.lt.s32.totalorder %s557, 3
        %s561 = scalar_select %p560, %s557, 3
        %p562 = scmp.lt.s32.totalorder %s25, 0
        %s563 = scalar_select %p562, %s25, 0
        %s564 = sadd.s32 %s563, %s561
        %s565 = smul.addr %s559, 4
        %s566 = sadd.s32 %s564, %s565
        %s567 = smul.addr %s566, 8
        %s568 = scalar_lea.vmem %s3, %s567
      $region52: #{attention_layer_forward.5} parent=47 // pred_fallthru
        _
    $region48: #{attention_layer_forward.5} parent=5 // pred_fallthru
      _
  $region6: #{attention_layer_forward.5} parent=0 // loop_footer
    %s13 = sadd.s32 1, %s9
  $region7: #{attention_layer_forward.5} parent=0 // loop_footer_branch
    %8 = sbr.rel target = $region3
  $region8: #{attention_layer_forward.5} parent=0 // loop_exit
    _

// kernel: attention_layer_forward.8
$region0: #{attention_layer_forward.8}
  #allocation0 [shape = 'u32[]', space=smem, size = 0x4, offset = 0x4, fixed_abs, tag = 'smem constant byte address 0x4 - core index']
  #allocation1 [shape = 'u32[144,128]{1,0:T(1,128)}', space=vmem, size = 0x12000, scoped, tag = 'internal scratch']
  #allocation2 [shape = 'f32[8,1]{1,0:T(8,128)}', space=vmem, size = 0x1000, scoped, tag = 'scratch operand']
  #allocation3 [shape = 'f32[8,1]{1,0:T(8,128)}', space=vmem, size = 0x1000, scoped, tag = 'scratch operand']
  #allocation4 [shape = 'f32[8,8]{1,0:T(8,128)}', space=vmem, size = 0x1000, scoped, tag = 'scratch operand']
  %s0 = inlined_call_operand.vmem [shape: f32[2,4,8,8], index: 0, kind: input, shape index: {}]
  %s1 = inlined_call_operand.vmem [shape: f32[2,4,8,8], index: 1, kind: input, shape index: {}]
  %s2 = inlined_call_operand.vmem [shape: f32[2,4,8,8], index: 2, kind: input, shape index: {}]
  %s3 = inlined_call_operand.vmem [shape: f32[2,4,8,8], index: 3, kind: output, shape index: {}]
  %s4 = sld [smem:[#allocation0]]
  $region53: #{attention_layer_forward.8} parent=0
    _
  %s6 = ssub.s32 1, %s4
  %s7 = scalar_select 0, %s6, %s4
  loop: start=0, step=1, limit=10
  $region2: #{attention_layer_forward.8} parent=0 // loop_pre_header
    _
  $region3: #{attention_layer_forward.8} parent=0 // loop_header
    %s9 = sphi 0, %s13
    %p10 = scmp.ge.s32.totalorder %s9, 10
    %s16 = sphi 0, %s42
    %s17 = sphi 0, %s38
    %s18 = sphi 0, %s34
    %s19 = sphi 0, %s30
    %s20 = sphi 0, %s16
    %s21 = sphi 0, %s17
    %s22 = sphi 0, %s18
    %s23 = sphi 0, %s19
    %s24 = sphi 0, %s20
    %s25 = sphi 0, %s21
    %s26 = sphi 0, %s22
    %s27 = sphi 0, %s23
    %s49 = sphi 0, %s51
    %s52 = sphi 0, %s49
    %s53 = sphi 0, %s52
    %s69 = sphi 0, %s53
    %s79 = sphi 0, %s81
    %s82 = sphi 0, %s79
    %s83 = sphi 0, %s82
    %s99 = sphi 0, %s83
    %s109 = sphi 0, %s111
    %s112 = sphi 0, %s109
    %s113 = sphi 0, %s112
    %s129 = sphi 0, %s113
    %s139 = sphi 0, %s141
    %s142 = sphi 0, %s139
    %s143 = sphi 0, %s142
    %s159 = sphi 0, %s143
  $region4: #{attention_layer_forward.8} parent=0 // loop_header_branch
    %12 = sbr.rel (%p10) target = $region8
  $region5: #{attention_layer_forward.8} parent=0 // loop_body
    %s14 = ssub.s32 %s9, 1
    %s15 = ssub.s32 %s9, 2
    %s28 = sadd.s32 1, %s19
    %p29 = scmp.ge.s32.totalorder %s28, 1
    %s30 = scalar_select %p29, 0, %s28
    %s31 = sadd.s32 1, %s18
    %s32 = scalar_select %p29, %s31, %s18
    %p33 = scmp.ge.s32.totalorder %s32, 1
    %s34 = scalar_select %p33, 0, %s32
    %s35 = sadd.s32 1, %s17
    %s36 = scalar_select %p33, %s35, %s17
    %p37 = scmp.ge.s32.totalorder %s36, 4
    %s38 = scalar_select %p37, 0, %s36
    %s39 = sadd.s32 1, %s16
    %s40 = scalar_select %p37, %s39, %s16
    %p41 = scmp.ge.s32.totalorder %s40, 2
    %s42 = scalar_select %p41, 0, %s40
    %s43 = ssub.s32 %s16, %s42
    %s44 = ssub.s32 %s17, %s38
    %s45 = sor.u32 %s43, %s44
    %s46 = ssub.s32 %s18, %s34
    %s47 = sor.u32 %s45, %s46
    %p48 = scmp.eq.s32.totalorder %s47, 0
    %s50 = sadd.s32 %s49, 1
    %s51 = scalar_select %p48, %s49, %s50
    %p54 = pneg %p48
    %p55 = scmp.eq.s32.totalorder %s9, 7
    %p56 = por %p54, %p55
    %p57 = scmp.ne.s32.totalorder %s49, %s52
    %p58 = scmp.eq.s32.totalorder %s9, 0
    %p59 = por %p57, %p58
    %p60 = scmp.ne.s32.totalorder %s49, %s52
    %p61 = scmp.eq.s32.totalorder %s14, 7
    %p62 = por %p60, %p61
    %p63 = scmp.ne.s32.totalorder %s52, %s53
    %p64 = scmp.eq.s32.totalorder %s14, 0
    %p65 = por %p63, %p64
    %p66 = scmp.ne.s32.totalorder %s52, %s53
    %p67 = scmp.eq.s32.totalorder %s15, 7
    %p68 = por %p66, %p67
    %p70 = scmp.ne.s32.totalorder %s53, %s69
    %p71 = scmp.eq.s32.totalorder %s15, 0
    %p72 = por %p70, %p71
    %s73 = ssub.s32 %s16, %s42
    %s74 = ssub.s32 %s17, %s38
    %s75 = sor.u32 %s73, %s74
    %s76 = ssub.s32 %s19, %s30
    %s77 = sor.u32 %s75, %s76
    %p78 = scmp.eq.s32.totalorder %s77, 0
    %s80 = sadd.s32 %s79, 1
    %s81 = scalar_select %p78, %s79, %s80
    %p84 = pneg %p78
    %p85 = scmp.eq.s32.totalorder %s9, 7
    %p86 = por %p84, %p85
    %p87 = scmp.ne.s32.totalorder %s79, %s82
    %p88 = scmp.eq.s32.totalorder %s9, 0
    %p89 = por %p87, %p88
    %p90 = scmp.ne.s32.totalorder %s79, %s82
    %p91 = scmp.eq.s32.totalorder %s14, 7
    %p92 = por %p90, %p91
    %p93 = scmp.ne.s32.totalorder %s82, %s83
    %p94 = scmp.eq.s32.totalorder %s14, 0
    %p95 = por %p93, %p94
    %p96 = scmp.ne.s32.totalorder %s82, %s83
    %p97 = scmp.eq.s32.totalorder %s15, 7
    %p98 = por %p96, %p97
    %p100 = scmp.ne.s32.totalorder %s83, %s99
    %p101 = scmp.eq.s32.totalorder %s15, 0
    %p102 = por %p100, %p101
    %s103 = ssub.s32 %s16, %s42
    %s104 = ssub.s32 %s17, %s38
    %s105 = sor.u32 %s103, %s104
    %s106 = ssub.s32 %s19, %s30
    %s107 = sor.u32 %s105, %s106
    %p108 = scmp.eq.s32.totalorder %s107, 0
    %s110 = sadd.s32 %s109, 1
    %s111 = scalar_select %p108, %s109, %s110
    %p114 = pneg %p108
    %p115 = scmp.eq.s32.totalorder %s9, 7
    %p116 = por %p114, %p115
    %p117 = scmp.ne.s32.totalorder %s109, %s112
    %p118 = scmp.eq.s32.totalorder %s9, 0
    %p119 = por %p117, %p118
    %p120 = scmp.ne.s32.totalorder %s109, %s112
    %p121 = scmp.eq.s32.totalorder %s14, 7
    %p122 = por %p120, %p121
    %p123 = scmp.ne.s32.totalorder %s112, %s113
    %p124 = scmp.eq.s32.totalorder %s14, 0
    %p125 = por %p123, %p124
    %p126 = scmp.ne.s32.totalorder %s112, %s113
    %p127 = scmp.eq.s32.totalorder %s15, 7
    %p128 = por %p126, %p127
    %p130 = scmp.ne.s32.totalorder %s113, %s129
    %p131 = scmp.eq.s32.totalorder %s15, 0
    %p132 = por %p130, %p131
    %s133 = ssub.s32 %s16, %s42
    %s134 = ssub.s32 %s17, %s38
    %s135 = sor.u32 %s133, %s134
    %s136 = ssub.s32 %s18, %s34
    %s137 = sor.u32 %s135, %s136
    %p138 = scmp.eq.s32.totalorder %s137, 0
    %s140 = sadd.s32 %s139, 1
    %s141 = scalar_select %p138, %s139, %s140
    %p144 = pneg %p138
    %p145 = scmp.eq.s32.totalorder %s9, 7
    %p146 = por %p144, %p145
    %p147 = scmp.ne.s32.totalorder %s139, %s142
    %p148 = scmp.eq.s32.totalorder %s9, 0
    %p149 = por %p147, %p148
    %p150 = scmp.ne.s32.totalorder %s139, %s142
    %p151 = scmp.eq.s32.totalorder %s14, 7
    %p152 = por %p150, %p151
    %p153 = scmp.ne.s32.totalorder %s142, %s143
    %p154 = scmp.eq.s32.totalorder %s14, 0
    %p155 = por %p153, %p154
    %p156 = scmp.ne.s32.totalorder %s142, %s143
    %p157 = scmp.eq.s32.totalorder %s15, 7
    %p158 = por %p156, %p157
    %p160 = scmp.ne.s32.totalorder %s143, %s159
    %p161 = scmp.eq.s32.totalorder %s15, 0
    %p162 = por %p160, %p161
    %p163 = scmp.le.s32.totalorder 1, %s9
    %p164 = scmp.lt.s32.totalorder %s9, 9
    %p165 = pnand %p163, %p164
    %p166 = pneg %p165
    // Predicated region
    $region9: #{attention_layer_forward.8} parent=5 // pred_check
      _
    $region10: #{attention_layer_forward.8} parent=5 // pred_check_branch
      %168 = sbr.rel (%p165) target = $region12
    $region11: #{attention_layer_forward.8} parent=5 // pred_region
      %s169 = ssub.s32 %s9, 1
    $region12: #{attention_layer_forward.8} parent=5 // pred_fallthru
      _
    %p170 = scmp.lt.s32.totalorder %s9, 8
    // Predicated region
    $region13: #{attention_layer_forward.8} parent=5 // pred_check
      %p171 = pneg %p170
    $region14: #{attention_layer_forward.8} parent=5 // pred_check_branch
      %173 = sbr.rel (%p171) target = $region16
    $region15: #{attention_layer_forward.8} parent=5 // pred_region
      // Predicated region
      $region17: #{attention_layer_forward.8} parent=15 // pred_check
        %p174 = pneg %p59
      $region18: #{attention_layer_forward.8} parent=15 // pred_check_branch
        %176 = sbr.rel (%p174) target = $region20
      $region19: #{attention_layer_forward.8} parent=15 // pred_region
        %p177 = scmp.lt.s32.totalorder %s16, 1
        %s178 = scalar_select %p177, %s16, 1
        %p179 = scmp.lt.s32.totalorder %s17, 3
        %s180 = scalar_select %p179, %s17, 3
        %p181 = scmp.lt.s32.totalorder %s18, 0
        %s182 = scalar_select %p181, %s18, 0
        %s183 = sadd.s32 %s182, %s180
        %s184 = smul.addr %s178, 4
        %s185 = sadd.s32 %s183, %s184
        %s186 = smul.addr %s185, 8
        %s187 = scalar_lea.vmem %s0, %s186
      $region20: #{attention_layer_forward.8} parent=15 // pred_fallthru
        _
      // Predicated region
      $region21: #{attention_layer_forward.8} parent=15 // pred_check
        %p188 = pneg %p89
      $region22: #{attention_layer_forward.8} parent=15 // pred_check_branch
        %190 = sbr.rel (%p188) target = $region24
      $region23: #{attention_layer_forward.8} parent=15 // pred_region
        %p191 = scmp.lt.s32.totalorder %s16, 1
        %s192 = scalar_select %p191, %s16, 1
        %p193 = scmp.lt.s32.totalorder %s17, 3
        %s194 = scalar_select %p193, %s17, 3
        %p195 = scmp.lt.s32.totalorder %s19, 0
        %s196 = scalar_select %p195, %s19, 0
        %s197 = sadd.s32 %s196, %s194
        %s198 = smul.addr %s192, 4
        %s199 = sadd.s32 %s197, %s198
        %s200 = smul.addr %s199, 8
        %s201 = scalar_lea.vmem %s1, %s200
      $region24: #{attention_layer_forward.8} parent=15 // pred_fallthru
        _
      // Predicated region
      $region25: #{attention_layer_forward.8} parent=15 // pred_check
        %p202 = pneg %p119
      $region26: #{attention_layer_forward.8} parent=15 // pred_check_branch
        %204 = sbr.rel (%p202) target = $region28
      $region27: #{attention_layer_forward.8} parent=15 // pred_region
        %p205 = scmp.lt.s32.totalorder %s16, 1
        %s206 = scalar_select %p205, %s16, 1
        %p207 = scmp.lt.s32.totalorder %s17, 3
        %s208 = scalar_select %p207, %s17, 3
        %p209 = scmp.lt.s32.totalorder %s19, 0
        %s210 = scalar_select %p209, %s19, 0
        %s211 = sadd.s32 %s210, %s208
        %s212 = smul.addr %s206, 4
        %s213 = sadd.s32 %s211, %s212
        %s214 = smul.addr %s213, 8
        %s215 = scalar_lea.vmem %s2, %s214
      $region28: #{attention_layer_forward.8} parent=15 // pred_fallthru
        _
    $region16: #{attention_layer_forward.8} parent=5 // pred_fallthru
      _
    %p216 = scmp.le.s32.totalorder 1, %s9
    %p217 = scmp.lt.s32.totalorder %s9, 9
    %p218 = pnand %p216, %p217
    %p219 = pneg %p218
    // Predicated region
    $region29: #{attention_layer_forward.8} parent=5 // pred_check
      _
    $region30: #{attention_layer_forward.8} parent=5 // pred_check_branch
      %221 = sbr.rel (%p218) target = $region32
    $region31: #{attention_layer_forward.8} parent=5 // pred_region
      %s222 = ssub.s32 %s9, 1
      %p223 = scmp.lt.s32.totalorder %s20, 1
      %s224 = scalar_select %p223, %s20, 1
      %p225 = scmp.lt.s32.totalorder %s21, 3
      %s226 = scalar_select %p225, %s21, 3
      %p227 = scmp.lt.s32.totalorder %s22, 0
      %s228 = scalar_select %p227, %s22, 0
      %s229 = sadd.s32 %s228, %s226
      %s230 = smul.addr %s224, 4
      %s231 = sadd.s32 %s229, %s230
      %s232 = smul.addr %s231, 8
      %s233 = scalar_lea.vmem %s0, %s232
      %p234 = pneg %p65
      %p235 = pneg %p62
      %p236 = scmp.lt.s32.totalorder %s20, 1
      %s237 = scalar_select %p236, %s20, 1
      %p238 = scmp.lt.s32.totalorder %s21, 3
      %s239 = scalar_select %p238, %s21, 3
      %p240 = scmp.lt.s32.totalorder %s23, 0
      %s241 = scalar_select %p240, %s23, 0
      %s242 = sadd.s32 %s241, %s239
      %s243 = smul.addr %s237, 4
      %s244 = sadd.s32 %s242, %s243
      %s245 = smul.addr %s244, 8
      %s246 = scalar_lea.vmem %s1, %s245
      %p247 = pneg %p95
      %p248 = pneg %p92
      %p249 = scmp.lt.s32.totalorder %s20, 1
      %s250 = scalar_select %p249, %s20, 1
      %p251 = scmp.lt.s32.totalorder %s21, 3
      %s252 = scalar_select %p251, %s21, 3
      %p253 = scmp.lt.s32.totalorder %s23, 0
      %s254 = scalar_select %p253, %s23, 0
      %s255 = sadd.s32 %s254, %s252
      %s256 = smul.addr %s250, 4
      %s257 = sadd.s32 %s255, %s256
      %s258 = smul.addr %s257, 8
      %s259 = scalar_lea.vmem %s2, %s258
      %p260 = pneg %p125
      %p261 = pneg %p122
      %p262 = pneg %p155
      %p263 = pneg %p152
      %p264 = scmp.lt.s32.totalorder %s20, 1
      %s265 = scalar_select %p264, %s20, 1
      %p266 = scmp.lt.s32.totalorder %s21, 3
      %s267 = scalar_select %p266, %s21, 3
      %p268 = scmp.lt.s32.totalorder %s22, 0
      %s269 = scalar_select %p268, %s22, 0
      %s270 = sadd.s32 %s269, %s267
      %s271 = smul.addr %s265, 4
      %s272 = sadd.s32 %s270, %s271
      %s273 = smul.addr %s272, 8
      %s274 = scalar_lea.vmem %s3, %s273
      %p275 = scmp.lt.s32.totalorder %s20, 1
      %s276 = scalar_select %p275, %s20, 1
      %p277 = scmp.lt.s32.totalorder %s21, 3
      %s278 = scalar_select %p277, %s21, 3
      %p279 = scmp.lt.s32.totalorder %s22, 0
      %s280 = scalar_select %p279, %s22, 0
      %s281 = sadd.s32 %s280, %s278
      %s282 = smul.addr %s276, 4
      %s283 = sadd.s32 %s281, %s282
      %s284 = smul.addr %s283, 8
      %s285 = scalar_lea.vmem %s0, %s284
      %p286 = scmp.lt.s32.totalorder %s20, 1
      %s287 = scalar_select %p286, %s20, 1
      %p288 = scmp.lt.s32.totalorder %s21, 3
      %s289 = scalar_select %p288, %s21, 3
      %p290 = scmp.lt.s32.totalorder %s23, 0
      %s291 = scalar_select %p290, %s23, 0
      %s292 = sadd.s32 %s291, %s289
      %s293 = smul.addr %s287, 4
      %s294 = sadd.s32 %s292, %s293
      %s295 = smul.addr %s294, 8
      %s296 = scalar_lea.vmem %s1, %s295
      %p297 = scmp.lt.s32.totalorder %s20, 1
      %s298 = scalar_select %p297, %s20, 1
      %p299 = scmp.lt.s32.totalorder %s21, 3
      %s300 = scalar_select %p299, %s21, 3
      %p301 = scmp.lt.s32.totalorder %s23, 0
      %s302 = scalar_select %p301, %s23, 0
      %s303 = sadd.s32 %s302, %s300
      %s304 = smul.addr %s298, 4
      %s305 = sadd.s32 %s303, %s304
      %s306 = smul.addr %s305, 8
      %s307 = scalar_lea.vmem %s2, %s306
      %p308 = scmp.lt.s32.totalorder %s20, 1
      %s309 = scalar_select %p308, %s20, 1
      %p310 = scmp.lt.s32.totalorder %s21, 3
      %s311 = scalar_select %p310, %s21, 3
      %p312 = scmp.lt.s32.totalorder %s22, 0
      %s313 = scalar_select %p312, %s22, 0
      %s314 = sadd.s32 %s313, %s311
      %s315 = smul.addr %s309, 4
      %s316 = sadd.s32 %s314, %s315
      %s317 = smul.addr %s316, 8
      %s318 = scalar_lea.vmem %s3, %s317
      %p319 = scmp.eq.s32.totalorder %s23, 0
      // Predicated region
      $region33: #{attention_layer_forward.8} parent=31 // pred_check
        %p320 = pneg %p319
      $region34: #{attention_layer_forward.8} parent=31 // pred_check_branch
        %322 = sbr.rel (%p320) target = $region36
      $region35: #{attention_layer_forward.8} parent=31 // pred_region
        %vm323 = vcmask 7168
        %324 = vst.msk [vmem:[#allocation2] sm:$0xff] %vm323, -inf
        %325 = vst.msk [vmem:[#allocation3] sm:$0xff] %vm323, 0.0
        %vm326 = vcmask 64512
        %327 = vst.msk [vmem:[#allocation4] sm:$0xff] %vm326, 0.0
      $region36: #{attention_layer_forward.8} parent=31 // pred_fallthru
        _
      %v328 = vld [vmem:[%s285] sm:$0xff]
      %v329 = vld [vmem:[%s296] sm:$0xff]
      %vm330 = vcmask 64512
      %v332 = vsel %vm330, %v328, 0
      %v335 = vsel %vm330, %v329, 0
      %337 = vmatprep.subr.mxu0 0.0
      %338 = vmatpush1.xpose.msra.mxu0 0.0
      %339 = vmatprep.subr.mxu0 0.0
      %340 = vmatpush1.xpose.msra.mxu0 0.0
      %341 = vmatprep.subr.mxu0 0.0
      %342 = vmatpush1.xpose.msra.mxu0 0.0
      %343 = vmatprep.subr.mxu0 0.0
      %344 = vmatpush1.xpose.msra.mxu0 0.0
      %345 = vmatprep.subr.mxu0 0.0
      %346 = vmatpush1.xpose.msra.mxu0 0.0
      %347 = vmatprep.subr.mxu0 0.0
      %348 = vmatpush1.xpose.msra.mxu0 0.0
      %349 = vmatprep.subr.mxu0 0.0
      %350 = vmatpush1.xpose.msra.mxu0 0.0
      %351 = vmatprep.subr.mxu0 0.0
      %352 = vmatpush1.xpose.msra.mxu0 0.0
      %353 = vmatprep.subr.mxu0 0.0
      %354 = vmatpush1.xpose.msra.mxu0 0.0
      %355 = vmatprep.subr.mxu0 0.0
      %356 = vmatpush1.xpose.msra.mxu0 0.0
      %357 = vmatprep.subr.mxu0 0.0
      %358 = vmatpush1.xpose.msra.mxu0 0.0
      %359 = vmatprep.subr.mxu0 0.0
      %360 = vmatpush1.xpose.msra.mxu0 0.0
      %361 = vmatprep.subr.mxu0 0.0
      %362 = vmatpush1.xpose.msra.mxu0 0.0
      %363 = vmatprep.subr.mxu0 0.0
      %364 = vmatpush1.xpose.msra.mxu0 0.0
      %365 = vmatprep.subr.mxu0 0.0
      %366 = vmatpush1.xpose.msra.mxu0 0.0
      %367 = vmatprep.subr.mxu0 0.0
      %368 = vmatpush1.xpose.msra.mxu0 %v335
      %369 = vmatprep.subr.mxu0 0.0
      %370 = vmatpush2.xpose.msra.mxu0 0.0
      %371 = vmatprep.subr.mxu0 0.0
      %372 = vmatpush2.xpose.msra.mxu0 0.0
      %373 = vmatprep.subr.mxu0 0.0
      %374 = vmatpush2.xpose.msra.mxu0 0.0
      %375 = vmatprep.subr.mxu0 0.0
      %376 = vmatpush2.xpose.msra.mxu0 0.0
      %377 = vmatprep.subr.mxu0 0.0
      %378 = vmatpush2.xpose.msra.mxu0 0.0
      %379 = vmatprep.subr.mxu0 0.0
      %380 = vmatpush2.xpose.msra.mxu0 0.0
      %381 = vmatprep.subr.mxu0 0.0
      %382 = vmatpush2.xpose.msra.mxu0 0.0
      %383 = vmatprep.subr.mxu0 0.0
      %384 = vmatpush2.xpose.msra.mxu0 0.0
      %385 = vmatprep.subr.mxu0 0.0
      %386 = vmatpush2.xpose.msra.mxu0 0.0
      %387 = vmatprep.subr.mxu0 0.0
      %388 = vmatpush2.xpose.msra.mxu0 0.0
      %389 = vmatprep.subr.mxu0 0.0
      %390 = vmatpush2.xpose.msra.mxu0 0.0
      %391 = vmatprep.subr.mxu0 0.0
      %392 = vmatpush2.xpose.msra.mxu0 0.0
      %393 = vmatprep.subr.mxu0 0.0
      %394 = vmatpush2.xpose.msra.mxu0 0.0
      %395 = vmatprep.subr.mxu0 0.0
      %396 = vmatpush2.xpose.msra.mxu0 0.0
      %397 = vmatprep.subr.mxu0 0.0
      %398 = vmatpush2.xpose.msra.mxu0 0.0
      %399 = vmatprep.subr.mxu0 0.0
      %400 = vmatpush2.xpose.msra.mxu0 0.0
      %401 = vmatprep.mubr.f32.mxu0 0.0
      %402 = vmatmul.mubr.f32.gmra.mxu0 %v332
      %v403 = vpop.f32.mrf.mxu0
      %v404 = vadd.f32 0.0, %v403
      %v405 = vpop.f32.mrf.mxu0
      %406 = vdwg.mxu0
      %v407 = vld [vmem:[#allocation2] sm:$0xff]
      %v408 = vsel %vm330, %v404, -inf
      %409 = vmax.xlane.f32.xlu0 %v408
      %v410 = vpop.xlane.xlu0 %409
      %v411 = vmax.f32 %v407, %v410
      %v412 = vsub.f32 %v407, %v411
      %v413 = vmul.f32 %v412, 1.442695
      %v414 = vpow.pop %v413
      %416 = vset.pattern.permute.xlu0 0
      %417 = vperm.xlu0 %416, %v411
      %v418 = vpop.permute.xlu0 %417
      %v420 = vsub.f32 %v404, %v418
      %v421 = vmul.f32 %v420, 1.442695
      %v422 = vpow.pop %v421
      %v423 = vld [vmem:[#allocation3] sm:$0xff]
      %v424 = vmul.f32 %v414, %v423
      %v425 = vsel %vm330, %v422, 0.0
      %426 = vadd.xlane.f32.xlu0 %v425
      %v427 = vpop.xlane.xlu0 %426
      %v428 = vadd.f32 %v424, %v427
      %vm429 = vcmask 7168
      %430 = vst.msk [vmem:[#allocation3] sm:$0xff] %vm429, %v428
      %v431 = vld [vmem:[#allocation4] sm:$0xff]
      %433 = vset.pattern.permute.xlu0 0
      %434 = vperm.xlu0 %433, %v414
      %v435 = vpop.permute.xlu0 %434
      %v437 = vmul.f32 %v435, %v431
      %v438 = vld [vmem:[%s307] sm:$0xff]
      %v440 = vsel %vm330, %v422, 0
      %442 = vmatprep.subr.mxu0 0.0
      %443 = vmatpush1.msra.mxu0 0.0
      %444 = vmatprep.subr.mxu0 0.0
      %445 = vmatpush1.msra.mxu0 0.0
      %446 = vmatprep.subr.mxu0 0.0
      %447 = vmatpush1.msra.mxu0 0.0
      %448 = vmatprep.subr.mxu0 0.0
      %449 = vmatpush1.msra.mxu0 0.0
      %450 = vmatprep.subr.mxu0 0.0
      %451 = vmatpush1.msra.mxu0 0.0
      %452 = vmatprep.subr.mxu0 0.0
      %453 = vmatpush1.msra.mxu0 0.0
      %454 = vmatprep.subr.mxu0 0.0
      %455 = vmatpush1.msra.mxu0 0.0
      %456 = vmatprep.subr.mxu0 0.0
      %457 = vmatpush1.msra.mxu0 0.0
      %458 = vmatprep.subr.mxu0 0.0
      %459 = vmatpush1.msra.mxu0 0.0
      %460 = vmatprep.subr.mxu0 0.0
      %461 = vmatpush1.msra.mxu0 0.0
      %462 = vmatprep.subr.mxu0 0.0
      %463 = vmatpush1.msra.mxu0 0.0
      %464 = vmatprep.subr.mxu0 0.0
      %465 = vmatpush1.msra.mxu0 0.0
      %466 = vmatprep.subr.mxu0 0.0
      %467 = vmatpush1.msra.mxu0 0.0
      %468 = vmatprep.subr.mxu0 0.0
      %469 = vmatpush1.msra.mxu0 0.0
      %470 = vmatprep.subr.mxu0 0.0
      %471 = vmatpush1.msra.mxu0 0.0
      %472 = vmatprep.subr.mxu0 0.0
      %473 = vmatpush1.msra.mxu0 %v438
      %474 = vmatprep.subr.mxu0 0.0
      %475 = vmatpush2.msra.mxu0 0.0
      %476 = vmatprep.subr.mxu0 0.0
      %477 = vmatpush2.msra.mxu0 0.0
      %478 = vmatprep.subr.mxu0 0.0
      %479 = vmatpush2.msra.mxu0 0.0
      %480 = vmatprep.subr.mxu0 0.0
      %481 = vmatpush2.msra.mxu0 0.0
      %482 = vmatprep.subr.mxu0 0.0
      %483 = vmatpush2.msra.mxu0 0.0
      %484 = vmatprep.subr.mxu0 0.0
      %485 = vmatpush2.msra.mxu0 0.0
      %486 = vmatprep.subr.mxu0 0.0
      %487 = vmatpush2.msra.mxu0 0.0
      %488 = vmatprep.subr.mxu0 0.0
      %489 = vmatpush2.msra.mxu0 0.0
      %490 = vmatprep.subr.mxu0 0.0
      %491 = vmatpush2.msra.mxu0 0.0
      %492 = vmatprep.subr.mxu0 0.0
      %493 = vmatpush2.msra.mxu0 0.0
      %494 = vmatprep.subr.mxu0 0.0
      %495 = vmatpush2.msra.mxu0 0.0
      %496 = vmatprep.subr.mxu0 0.0
      %497 = vmatpush2.msra.mxu0 0.0
      %498 = vmatprep.subr.mxu0 0.0
      %499 = vmatpush2.msra.mxu0 0.0
      %500 = vmatprep.subr.mxu0 0.0
      %501 = vmatpush2.msra.mxu0 0.0
      %502 = vmatprep.subr.mxu0 0.0
      %503 = vmatpush2.msra.mxu0 0.0
      %504 = vmatprep.subr.mxu0 0.0
      %505 = vmatpush2.msra.mxu0 0.0
      %506 = vmatprep.mubr.f32.mxu0 0.0
      %507 = vmatmul.mubr.f32.gmra.mxu0 %v440
      %v508 = vpop.f32.mrf.mxu0
      %v509 = vadd.f32 0.0, %v508
      %v510 = vpop.f32.mrf.mxu0
      %511 = vdwg.mxu0
      %v512 = vadd.f32 %v437, %v509
      %513 = vst.msk [vmem:[#allocation4] sm:$0xff] %vm330, %v512
      %514 = vst.msk [vmem:[#allocation2] sm:$0xff] %vm429, %v411
      // Predicated region
      $region37: #{attention_layer_forward.8} parent=31 // pred_check
        %p515 = pneg %p319
      $region38: #{attention_layer_forward.8} parent=31 // pred_check_branch
        %517 = sbr.rel (%p515) target = $region40
      $region39: #{attention_layer_forward.8} parent=31 // pred_region
        %v518 = vld [vmem:[#allocation4] sm:$0xff]
        %v519 = vld [vmem:[#allocation3] sm:$0xff]
        %521 = vset.pattern.permute.xlu0 0
        %522 = vperm.xlu0 %521, %v519
        %v523 = vpop.permute.xlu0 %522
        %v525 = vrcp.pop %v523
        %v526 = vmul.f32 %v518, %v525
        %527 = vst.msk [vmem:[%s318] sm:$0xff] %vm330, %v526
      $region40: #{attention_layer_forward.8} parent=31 // pred_fallthru
        _
      %p528 = scmp.lt.s32.totalorder %s20, 1
      %s529 = scalar_select %p528, %s20, 1
      %p530 = scmp.lt.s32.totalorder %s21, 3
      %s531 = scalar_select %p530, %s21, 3
      %p532 = scmp.lt.s32.totalorder %s22, 0
      %s533 = scalar_select %p532, %s22, 0
      %s534 = sadd.s32 %s533, %s531
      %s535 = smul.addr %s529, 4
      %s536 = sadd.s32 %s534, %s535
      %s537 = smul.addr %s536, 8
      %s538 = scalar_lea.vmem %s3, %s537
      // Predicated region
      $region41: #{attention_layer_forward.8} parent=31 // pred_check
        %p539 = pneg %p152
      $region42: #{attention_layer_forward.8} parent=31 // pred_check_branch
        %541 = sbr.rel (%p539) target = $region44
      $region43: #{attention_layer_forward.8} parent=31 // pred_region
        _
      $region44: #{attention_layer_forward.8} parent=31 // pred_fallthru
        _
    $region32: #{attention_layer_forward.8} parent=5 // pred_fallthru
      _
    %p542 = scmp.le.s32.totalorder 2, %s9
    // Predicated region
    $region45: #{attention_layer_forward.8} parent=5 // pred_check
      %p543 = pneg %p542
    $region46: #{attention_layer_forward.8} parent=5 // pred_check_branch
      %545 = sbr.rel (%p543) target = $region48
    $region47: #{attention_layer_forward.8} parent=5 // pred_region
      %s546 = ssub.s32 %s9, 2
      // Predicated region
      $region49: #{attention_layer_forward.8} parent=47 // pred_check
        %p547 = pneg %p158
      $region50: #{attention_layer_forward.8} parent=47 // pred_check_branch
        %549 = sbr.rel (%p547) target = $region52
      $region51: #{attention_layer_forward.8} parent=47 // pred_region
        %p550 = scmp.lt.s32.totalorder %s24, 1
        %s551 = scalar_select %p550, %s24, 1
        %p552 = scmp.lt.s32.totalorder %s25, 3
        %s553 = scalar_select %p552, %s25, 3
        %p554 = scmp.lt.s32.totalorder %s26, 0
        %s555 = scalar_select %p554, %s26, 0
        %s556 = sadd.s32 %s555, %s553
        %s557 = smul.addr %s551, 4
        %s558 = sadd.s32 %s556, %s557
        %s559 = smul.addr %s558, 8
        %s560 = scalar_lea.vmem %s3, %s559
      $region52: #{attention_layer_forward.8} parent=47 // pred_fallthru
        _
    $region48: #{attention_layer_forward.8} parent=5 // pred_fallthru
      _
  $region6: #{attention_layer_forward.8} parent=0 // loop_footer
    %s13 = sadd.s32 1, %s9
  $region7: #{attention_layer_forward.8} parent=0 // loop_footer_branch
    %8 = sbr.rel target = $region3
  $region8: #{attention_layer_forward.8} parent=0 // loop_exit
    _

</llo_original>
